<compile_context>
chip_gen: v5e
topology: v5e:2x2
jax: 0.10.0
libtpu: 0.0.40
codegen_flags: <defaults>
</compile_context>

<pallas_src>
import functools

import jax
import jax.numpy as jnp
from jax.experimental import pallas as pl
from jax.experimental.pallas import tpu as pltpu


# ----------------------------- Pallas kernel -----------------------------

def _fused_moe_kernel(gid_ref,                 # scalar-prefetch: [num_tiles] int32 (SMEM)
                      x_ref, s_ref,            # [T, H] bf16, [T, 1] f32
                      sh_wgu_ref, sh_wd_ref,   # shared weights bf16: [H, 2*TI], [TI, H]
                      r_wgu_ref, r_wd_ref,     # routed-expert weights bf16 (same shapes)
                      out_ref,                 # [T, H] bf16
                      acc_ref,                 # VMEM scratch [T, H] f32
                      *, i_tile):
    del gid_ref                                # only consumed by the index_maps
    it = pl.program_id(1)                      # I-tile index (reduction axis, innermost)

    @pl.when(it == 0)
    def _():
        acc_ref[...] = jnp.zeros_like(acc_ref)

    x = x_ref[...]                             # bf16 [T, H]

    # ---- shared expert, this I-slice: one fused gate|up matmul ----
    gu = jnp.dot(x, sh_wgu_ref[...], preferred_element_type=jnp.float32)   # [T, 2*TI]
    g, u = gu[:, :i_tile], gu[:, i_tile:]      # lane-aligned slices (i_tile % 128 == 0)
    h = (g * jax.nn.sigmoid(g)) * u            # SiLU in f32
    o_sh = jnp.dot(h.astype(x.dtype), sh_wd_ref[...],
                   preferred_element_type=jnp.float32)

    # ---- routed expert, this I-slice.  (x*s) @ W == s * (x @ W): reuse the un-scaled
    #      bf16 LHS on the MXU and scale the f32 accumulator rows instead. ----
    s = s_ref[...]                             # [T, 1] f32 router score
    gu = jnp.dot(x, r_wgu_ref[...], preferred_element_type=jnp.float32)
    g, u = gu[:, :i_tile] * s, gu[:, i_tile:] * s
    h = (g * jax.nn.sigmoid(g)) * u
    o_r = jnp.dot(h.astype(x.dtype), r_wd_ref[...],
                  preferred_element_type=jnp.float32)

    acc_ref[...] += o_sh + o_r

    @pl.when(it == pl.num_programs(1) - 1)
    def _():
        out_ref[...] = acc_ref[...].astype(out_ref.dtype)   # bf16 store (lane-dense H)


def fused_moe(x_pad, s_pad, sh_wgu, sh_wd, r_wgu, r_wd, tile_gid,
              *, tile_rows, i_tile):
    n_pad, h = x_pad.shape
    i_total = sh_wd.shape[0]
    assert n_pad % tile_rows == 0 and i_total % i_tile == 0 and i_tile % 128 == 0
    num_tiles = n_pad // tile_rows
    num_i = i_total // i_tile

    # Advisory cost hint for the XLA scheduler around the custom call.
    cost = pl.CostEstimate(
        flops=int(12 * n_pad * h * i_total),          # 3 matmuls x 2 paths x 2 flops/MAC
        transcendentals=int(2 * n_pad * i_total),     # sigmoid (shared + routed)
        bytes_accessed=int(2 * n_pad * h * 2 + n_pad * 4
                           + (sh_wgu.size + sh_wd.size) * 2
                           + (r_wgu.size + r_wd.size) * 2),
    )

    return pl.pallas_call(
        functools.partial(_fused_moe_kernel, i_tile=i_tile),
        out_shape=jax.ShapeDtypeStruct((n_pad, h), jnp.bfloat16),
        grid_spec=pltpu.PrefetchScalarGridSpec(
            num_scalar_prefetch=1,                    # tile_gid -> SMEM
            grid=(num_tiles, num_i),                  # (token tiles, I tiles)
            in_specs=[
                pl.BlockSpec((tile_rows, h), lambda t, it, gid: (t, 0)),
                pl.BlockSpec((tile_rows, 1), lambda t, it, gid: (t, 0)),
                # shared-expert weights (streamed over I; VMEM-resident when num_i == 1)
                pl.BlockSpec((h, 2 * i_tile), lambda t, it, gid: (0, it)),
                pl.BlockSpec((i_tile, h), lambda t, it, gid: (it, 0)),
                # routed-expert weights: data-dependent expert pick; leading expert dim
                # squeezed (None == pl.Squeezed()) so the kernel sees 2-D refs.
                pl.BlockSpec((None, h, 2 * i_tile), lambda t, it, gid: (gid[t], 0, it)),
                pl.BlockSpec((None, i_tile, h), lambda t, it, gid: (gid[t], it, 0)),
            ],
            out_specs=pl.BlockSpec((tile_rows, h), lambda t, it, gid: (t, 0)),
            scratch_shapes=[pltpu.VMEM((tile_rows, h), jnp.float32)],
        ),
        compiler_params=pltpu.CompilerParams(
            dimension_semantics=("parallel", "arbitrary")),
        cost_estimate=cost,
    )(tile_gid, x_pad, s_pad, sh_wgu, sh_wd, r_wgu, r_wd)


# ----------------------------- Param prep (one time) -----------------------------

def _fuse_gate_up(wg, wu, i_tile):
    """[..., H, I] x2 -> [..., H, 2I], laid out per I-tile as [Wg_i | Wu_i]."""
    *lead, h, i = wg.shape
    ni = i // i_tile
    wg_t = wg.reshape(*lead, h, ni, i_tile)
    wu_t = wu.reshape(*lead, h, ni, i_tile)
    return jnp.stack([wg_t, wu_t], axis=-2).reshape(*lead, h, 2 * i)


def prepare_moe_params(params, *, i_tile, dtype=jnp.bfloat16):
    """Fuse gate|up and cast weights to bf16 ONCE (not every forward call)."""
    return {
        "gate_w": params["gate_w"].astype(jnp.float32),
        "sh_wgu": _fuse_gate_up(params["sh_wg"], params["sh_wu"], i_tile).astype(dtype),
        "sh_wd": params["sh_wd"].astype(dtype),
        "r_wgu": _fuse_gate_up(params["r_wg"], params["r_wu"], i_tile).astype(dtype),
        "r_wd": params["r_wd"].astype(dtype),
    }


# ----------------------------- Model wrapper -----------------------------

def llama4_moe_forward(x, prepared, *, tile_rows=128, i_tile=128):
    """x: [B, S, H] f32 -> [B, S, H] f32.  `prepared` from prepare_moe_params(i_tile=...)."""
    b, s, hdim = x.shape
    num_experts = prepared["r_wgu"].shape[0]
    n = b * s
    xf = x.reshape(n, hdim)

    # ---- Top-1 router (tiny matmul + bookkeeping, plain JAX) ----
    logits = xf @ prepared["gate_w"].T                           # [N, E]
    top_ids = jnp.argmax(logits, axis=-1).astype(jnp.int32)
    scores = jax.nn.sigmoid(jnp.max(logits, axis=-1, keepdims=True))   # [N, 1]

    # ---- Expert-sorted, group-padded layout (each group padded to tile_rows) ----
    perm = jnp.argsort(top_ids)
    inv_perm = jnp.argsort(perm).astype(jnp.int32)               # token -> sorted rank
    counts = jnp.zeros((num_experts,), jnp.int32).at[top_ids].add(1)
    group_pad = ((counts + tile_rows - 1) // tile_rows) * tile_rows
    pcum = jnp.cumsum(group_pad).astype(jnp.int32)
    pstart = jnp.concatenate([jnp.zeros((1,), jnp.int32), pcum[:-1]])
    off_ex = jnp.concatenate([jnp.zeros((1,), jnp.int32),
                              jnp.cumsum(counts).astype(jnp.int32)[:-1]])

    # Static padded length (worst case: every non-empty group pads by tile_rows-1).
    n_pad = ((n + num_experts * (tile_rows - 1) + tile_rows - 1)
             // tile_rows) * tile_rows
    num_tiles = n_pad // tile_rows

    # Destination padded row of every token; source token of every padded row.
    dest_tok = pstart[top_ids] + inv_perm - off_ex[top_ids]      # [N]
    src_tok = jnp.full((n_pad,), n, jnp.int32).at[dest_tok].set(
        jnp.arange(n, dtype=jnp.int32))                          # sentinel n -> zero row
    # Expert id of every row tile (tail tiles are all-zero rows; id is arbitrary).
    tile_gid = jnp.minimum(
        jnp.searchsorted(pcum, jnp.arange(num_tiles, dtype=jnp.int32) * tile_rows,
                         side="right"),
        num_experts - 1).astype(jnp.int32)

    # Cast to bf16 BEFORE the [N_pad, H] gather so the gather moves half the bytes.
    xf_ext = jnp.concatenate(
        [xf, jnp.zeros((1, hdim), xf.dtype)], axis=0).astype(jnp.bfloat16)
    sc_ext = jnp.concatenate([scores, jnp.zeros((1, 1), scores.dtype)], axis=0)
    x_pad = xf_ext[src_tok]                                      # [N_pad, H] bf16
    s_pad = sc_ext[src_tok]                                      # [N_pad, 1] f32

    # ---- Fused shared + routed SwiGLU Pallas kernel ----
    out_pad = fused_moe(x_pad, s_pad,
                        prepared["sh_wgu"], prepared["sh_wd"],
                        prepared["r_wgu"], prepared["r_wd"],
                        tile_gid, tile_rows=tile_rows, i_tile=i_tile)

    # ---- Unsort back to token order (bf16 gather), upcast at the end ----
    out = out_pad[dest_tok].astype(jnp.float32)
    return out.reshape(b, s, hdim)


# Pure-JAX f32 reference (dense per-token expert gather) for validation.
def llama4_moe_reference(x, params):
    b, s, hdim = x.shape
    xf = x.reshape(-1, hdim)

    def swiglu(t, wg, wu, wd):
        return (jax.nn.silu(t @ wg) * (t @ wu)) @ wd

    shared_out = swiglu(xf, params["sh_wg"], params["sh_wu"], params["sh_wd"])

    logits = xf @ params["gate_w"].T
    top_ids = jnp.argmax(logits, axis=-1)
    scores = jax.nn.sigmoid(jnp.max(logits, axis=-1, keepdims=True))
    xs = xf * scores

    wg_t = params["r_wg"][top_ids]                               # [N, H, I]
    wu_t = params["r_wu"][top_ids]
    wd_t = params["r_wd"][top_ids]                               # [N, I, H]
    g = jnp.einsum("nh,nhi->ni", xs, wg_t)
    u = jnp.einsum("nh,nhi->ni", xs, wu_t)
    routed = jnp.einsum("ni,nih->nh", jax.nn.silu(g) * u, wd_t)

    return (shared_out + routed).reshape(b, s, hdim)


# ----------------------------- Main -----------------------------

if __name__ == "__main__":
    # Small but lane-dense config (H, I multiples of 128): hidden=128,
    # intermediate=256, 8 routed experts, 1 shared expert.
    B, S, H, I, E = 2, 64, 128, 256, 8
    TILE_ROWS = 128      # 128 fills the MXU M dim on all gens (use 256 on v6e/v7x).
    I_TILE = 128         # 2 I-tiles here -> exercises the VMEM accumulator path.

    key = jax.random.PRNGKey(0)
    ks = jax.random.split(key, 8)

    def uinit(k, shape, fan_in):
        bound = 1.0 / jnp.sqrt(float(fan_in))                    # kaiming_uniform(a=sqrt(5))
        return jax.random.uniform(k, shape, jnp.float32, -bound, bound)

    params = {
        "gate_w": uinit(ks[0], (E, H), H),        # nn.Linear(H, E) weight [E, H]
        "sh_wg": uinit(ks[1], (H, I), H),         # shared SwiGLU (stored [in, out])
        "sh_wu": uinit(ks[2], (H, I), H),
        "sh_wd": uinit(ks[3], (I, H), I),
        "r_wg": uinit(ks[4], (E, H, I), H),       # routed GroupedSwiGLU: [E, in, out]
        "r_wu": uinit(ks[5], (E, H, I), H),
        "r_wd": uinit(ks[6], (E, I, H), I),
    }

    x = jax.random.normal(ks[7], (B, S, H), jnp.float32)

    prepared = prepare_moe_params(params, i_tile=I_TILE)         # one-time bf16 prep
    fwd = jax.jit(functools.partial(llama4_moe_forward,
                                    tile_rows=TILE_ROWS, i_tile=I_TILE))

    out = jax.block_until_ready(fwd(x, prepared))
    ref = jax.block_until_ready(llama4_moe_reference(x, params))

    assert out.shape == (B, S, H)
    # bf16 compute + bf16 output vs f32 reference -> loose-ish tolerance.
    assert jnp.allclose(out, ref, atol=3e-2, rtol=3e-2), (
        f"max abs diff {jnp.max(jnp.abs(out - ref))}")

    print("KERNEL_OK")
</pallas_src>

<mosaic_0001>
module attributes {stable_mosaic.version = 11 : i64} {
  func.func @_fused_moe_kernel(%arg0: i32, %arg1: i32, %arg2: memref<9xi32, #tpu.memory_space<smem>>, %arg3: memref<128x128xbf16, #tpu.memory_space<vmem>>, %arg4: memref<128x1xf32, #tpu.memory_space<vmem>>, %arg5: memref<128x256xbf16, #tpu.memory_space<vmem>>, %arg6: memref<128x128xbf16, #tpu.memory_space<vmem>>, %arg7: memref<1x128x256xbf16, #tpu.memory_space<vmem>>, %arg8: memref<1x128x128xbf16, #tpu.memory_space<vmem>>, %arg9: memref<128x128xbf16, #tpu.memory_space<vmem>>, %arg10: memref<128x128xf32, #tpu.memory_space<vmem>>) attributes {dimension_semantics = [#tpu.dimension_semantics<parallel>, #tpu.dimension_semantics<arbitrary>], iteration_bounds = array<i64: 9, 2>, scalar_prefetch = 1 : i64, scratch_operands = 1 : i64, tpu.core_type = #tpu.core_type<tc>, window_params = [{transform_indices = @transform_0, window_bounds = array<i64: 128, 128>}, {transform_indices = @transform_1, window_bounds = array<i64: 128, 1>}, {transform_indices = @transform_2, window_bounds = array<i64: 128, 256>}, {transform_indices = @transform_3, window_bounds = array<i64: 128, 128>}, {transform_indices = @transform_4, window_bounds = array<i64: 1, 128, 256>}, {transform_indices = @transform_5, window_bounds = array<i64: 1, 128, 128>}, {transform_indices = @transform_6, window_bounds = array<i64: 128, 128>}]} {
    %c0_i32 = arith.constant 0 : i32
    %0 = arith.cmpi eq, %arg1, %c0_i32 : i32
    %1 = arith.extui %0 : i1 to i32
    %c0_i32_0 = arith.constant 0 : i32
    %2 = arith.cmpi ne, %1, %c0_i32_0 : i32
    scf.if %2 {
      %cst_24 = arith.constant 0.000000e+00 : f32
      %46 = vector.broadcast %cst_24 : f32 to vector<128x128xf32>
      %c0_25 = arith.constant 0 : index
      %c0_26 = arith.constant 0 : index
      %47 = vector.load %arg10[%c0_25, %c0_26] : memref<128x128xf32, #tpu.memory_space<vmem>>, vector<128x128xf32>
      tpu.vector_store %arg10[%c0_25, %c0_26], %46 {strides = array<i32>} : memref<128x128xf32, #tpu.memory_space<vmem>>, vector<128x128xf32>,
    } else {
    }
    %c0 = arith.constant 0 : index
    %c0_1 = arith.constant 0 : index
    %3 = vector.load %arg3[%c0, %c0_1] : memref<128x128xbf16, #tpu.memory_space<vmem>>, vector<128x128xbf16>
    %c0_2 = arith.constant 0 : index
    %c0_3 = arith.constant 0 : index
    %4 = vector.load %arg5[%c0_2, %c0_3] : memref<128x256xbf16, #tpu.memory_space<vmem>>, vector<128x256xbf16>
    %cst = arith.constant dense<0.000000e+00> : vector<128x256xf32>
    %5 = tpu.matmul %3, %4, %cst {dimension_numbers = #tpu.dot_dimension_numbers<[1], [0], [0], [1], [0, 0, 1, 1], [], []>} : vector<128x128xbf16>, vector<128x256xbf16>, vector<128x256xf32> -> vector<128x256xf32>
    %6 = vector.extract_strided_slice %5 {offsets = [0, 0], sizes = [128, 128], strides = [1, 1]} : vector<128x256xf32> to vector<128x128xf32>
    %7 = vector.extract_strided_slice %5 {offsets = [0, 128], sizes = [128, 128], strides = [1, 1]} : vector<128x256xf32> to vector<128x128xf32>
    %8 = arith.negf %6 : vector<128x128xf32>
    %9 = math.exp %8 : vector<128x128xf32>
    %cst_4 = arith.constant 1.000000e+00 : f32
    %10 = vector.broadcast %cst_4 : f32 to vector<128x128xf32>
    %11 = arith.addf %10, %9 : vector<128x128xf32>
    %12 = arith.divf %10, %11 : vector<128x128xf32>
    %13 = arith.mulf %6, %12 : vector<128x128xf32>
    %14 = arith.mulf %13, %7 : vector<128x128xf32>
    %15 = arith.truncf %14 : vector<128x128xf32> to vector<128x128xbf16>
    %c0_5 = arith.constant 0 : index
    %c0_6 = arith.constant 0 : index
    %16 = vector.load %arg6[%c0_5, %c0_6] : memref<128x128xbf16, #tpu.memory_space<vmem>>, vector<128x128xbf16>
    %cst_7 = arith.constant dense<0.000000e+00> : vector<128x128xf32>
    %17 = tpu.matmul %15, %16, %cst_7 {dimension_numbers = #tpu.dot_dimension_numbers<[1], [0], [0], [1], [0, 0, 1, 1], [], []>} : vector<128x128xbf16>, vector<128x128xbf16>, vector<128x128xf32> -> vector<128x128xf32>
    %c0_8 = arith.constant 0 : index
    %c0_9 = arith.constant 0 : index
    %18 = vector.load %arg4[%c0_8, %c0_9] : memref<128x1xf32, #tpu.memory_space<vmem>>, vector<128x1xf32>
    %c0_10 = arith.constant 0 : index
    %c0_11 = arith.constant 0 : index
    %c0_12 = arith.constant 0 : index
    %19 = vector.load %arg7[%c0_10, %c0_11, %c0_12] : memref<1x128x256xbf16, #tpu.memory_space<vmem>>, vector<1x128x256xbf16>
    %20 = vector.shape_cast %19 : vector<1x128x256xbf16> to vector<128x256xbf16>
    %cst_13 = arith.constant dense<0.000000e+00> : vector<128x256xf32>
    %21 = tpu.matmul %3, %20, %cst_13 {dimension_numbers = #tpu.dot_dimension_numbers<[1], [0], [0], [1], [0, 0, 1, 1], [], []>} : vector<128x128xbf16>, vector<128x256xbf16>, vector<128x256xf32> -> vector<128x256xf32>
    %22 = vector.extract_strided_slice %21 {offsets = [0, 0], sizes = [128, 128], strides = [1, 1]} : vector<128x256xf32> to vector<128x128xf32>
    %23 = vector.broadcast %18 : vector<128x1xf32> to vector<128x128xf32>
    %24 = arith.mulf %22, %23 : vector<128x128xf32>
    %25 = vector.extract_strided_slice %21 {offsets = [0, 128], sizes = [128, 128], strides = [1, 1]} : vector<128x256xf32> to vector<128x128xf32>
    %26 = vector.broadcast %18 : vector<128x1xf32> to vector<128x128xf32>
    %27 = arith.mulf %25, %26 : vector<128x128xf32>
    %28 = arith.negf %24 : vector<128x128xf32>
    %29 = math.exp %28 : vector<128x128xf32>
    %cst_14 = arith.constant 1.000000e+00 : f32
    %30 = vector.broadcast %cst_14 : f32 to vector<128x128xf32>
    %31 = arith.addf %30, %29 : vector<128x128xf32>
    %32 = arith.divf %30, %31 : vector<128x128xf32>
    %33 = arith.mulf %24, %32 : vector<128x128xf32>
    %34 = arith.mulf %33, %27 : vector<128x128xf32>
    %35 = arith.truncf %34 : vector<128x128xf32> to vector<128x128xbf16>
    %c0_15 = arith.constant 0 : index
    %c0_16 = arith.constant 0 : index
    %c0_17 = arith.constant 0 : index
    %36 = vector.load %arg8[%c0_15, %c0_16, %c0_17] : memref<1x128x128xbf16, #tpu.memory_space<vmem>>, vector<1x128x128xbf16>
    %37 = vector.shape_cast %36 : vector<1x128x128xbf16> to vector<128x128xbf16>
    %cst_18 = arith.constant dense<0.000000e+00> : vector<128x128xf32>
    %38 = tpu.matmul %35, %37, %cst_18 {dimension_numbers = #tpu.dot_dimension_numbers<[1], [0], [0], [1], [0, 0, 1, 1], [], []>} : vector<128x128xbf16>, vector<128x128xbf16>, vector<128x128xf32> -> vector<128x128xf32>
    %c0_19 = arith.constant 0 : index
    %c0_20 = arith.constant 0 : index
    %39 = vector.load %arg10[%c0_19, %c0_20] : memref<128x128xf32, #tpu.memory_space<vmem>>, vector<128x128xf32>
    %40 = arith.addf %17, %38 : vector<128x128xf32>
    %41 = arith.addf %39, %40 : vector<128x128xf32>
    %c0_21 = arith.constant 0 : index
    %c0_22 = arith.constant 0 : index
    %42 = vector.load %arg10[%c0_21, %c0_22] : memref<128x128xf32, #tpu.memory_space<vmem>>, vector<128x128xf32>
    tpu.vector_store %arg10[%c0_21, %c0_22], %41 {strides = array<i32>} : memref<128x128xf32, #tpu.memory_space<vmem>>, vector<128x128xf32>,
    %c1_i32 = arith.constant 1 : i32
    %43 = arith.cmpi eq, %arg1, %c1_i32 : i32
    %44 = arith.extui %43 : i1 to i32
    %c0_i32_23 = arith.constant 0 : i32
    %45 = arith.cmpi ne, %44, %c0_i32_23 : i32
    scf.if %45 {
      %c0_24 = arith.constant 0 : index
      %c0_25 = arith.constant 0 : index
      %46 = vector.load %arg10[%c0_24, %c0_25] : memref<128x128xf32, #tpu.memory_space<vmem>>, vector<128x128xf32>
      %47 = arith.truncf %46 : vector<128x128xf32> to vector<128x128xbf16>
      %c0_26 = arith.constant 0 : index
      %c0_27 = arith.constant 0 : index
      %48 = vector.load %arg9[%c0_26, %c0_27] : memref<128x128xbf16, #tpu.memory_space<vmem>>, vector<128x128xbf16>
      tpu.vector_store %arg9[%c0_26, %c0_27], %47 {strides = array<i32>} : memref<128x128xbf16, #tpu.memory_space<vmem>>, vector<128x128xbf16>,
    } else {
    }
    return
  }
  func.func @transform_0(%arg0: i32, %arg1: i32, %arg2: memref<9xi32, #tpu.memory_space<smem>>) -> (i32, i32) {
    %c0_i32 = arith.constant 0 : i32
    %c0_i32_0 = arith.constant 0 : i32
    return %arg0, %c0_i32 : i32, i32
  }
  func.func @transform_1(%arg0: i32, %arg1: i32, %arg2: memref<9xi32, #tpu.memory_space<smem>>) -> (i32, i32) {
    %c0_i32 = arith.constant 0 : i32
    %c0_i32_0 = arith.constant 0 : i32
    return %arg0, %c0_i32 : i32, i32
  }
  func.func @transform_2(%arg0: i32, %arg1: i32, %arg2: memref<9xi32, #tpu.memory_space<smem>>) -> (i32, i32) {
    %c0_i32 = arith.constant 0 : i32
    %c0_i32_0 = arith.constant 0 : i32
    return %c0_i32, %arg1 : i32, i32
  }
  func.func @transform_3(%arg0: i32, %arg1: i32, %arg2: memref<9xi32, #tpu.memory_space<smem>>) -> (i32, i32) {
    %c0_i32 = arith.constant 0 : i32
    %c0_i32_0 = arith.constant 0 : i32
    return %arg1, %c0_i32 : i32, i32
  }
  func.func @transform_4(%arg0: i32, %arg1: i32, %arg2: memref<9xi32, #tpu.memory_space<smem>>) -> (i32, i32, i32) {
    %0 = arith.index_cast %arg0 : i32 to index
    %1 = memref.load %arg2[%0] : memref<9xi32, #tpu.memory_space<smem>>
    %c0_i32 = arith.constant 0 : i32
    %c0_i32_0 = arith.constant 0 : i32
    return %1, %c0_i32, %arg1 : i32, i32, i32
  }
  func.func @transform_5(%arg0: i32, %arg1: i32, %arg2: memref<9xi32, #tpu.memory_space<smem>>) -> (i32, i32, i32) {
    %0 = arith.index_cast %arg0 : i32 to index
    %1 = memref.load %arg2[%0] : memref<9xi32, #tpu.memory_space<smem>>
    %c0_i32 = arith.constant 0 : i32
    %c0_i32_0 = arith.constant 0 : i32
    return %1, %arg1, %c0_i32 : i32, i32, i32
  }
  func.func @transform_6(%arg0: i32, %arg1: i32, %arg2: memref<9xi32, #tpu.memory_space<smem>>) -> (i32, i32) {
    %c0_i32 = arith.constant 0 : i32
    %c0_i32_0 = arith.constant 0 : i32
    return %arg0, %c0_i32 : i32, i32
  }
}

</mosaic_0001>

<llo_original>
// kernel: custom-call
$region0: #{custom-call}
  %s0 = inlined_call_operand.vmem [shape: u32[9], index: 0, kind: output, shape index: {}]

// kernel: llama4_moe_forward.1
$region0: #{llama4_moe_forward.1}
  #allocation0 [shape = 'u32[]', space=smem, size = 0x4, offset = 0x4, fixed_abs, tag = 'smem constant byte address 0x4 - core index']
  #allocation1 [shape = 'u32[72,128]{1,0:T(1,128)}', space=vmem, size = 0x9000, scoped, tag = 'internal scratch']
  #allocation2 [shape = 'f32[128,128]{1,0:T(8,128)}', space=vmem, size = 0x10000, scoped, tag = 'scratch operand']
  #allocation3 [shape = 's32[1]{0}', space=sflag, size = 0x4, scoped, tag = 'scoped memory for llama4_moe_forward.1']
  #allocation4 [shape = 'u8[512]{0}', space=smem, size = 0x200, scoped, tag = 'prefetched SMEM operand 0']
  %s0 = inlined_call_operand.vmem [shape: s32[9], index: 0, kind: input, shape index: {}]
  %s1 = inlined_call_operand.vmem [shape: bf16[1152,128], index: 1, kind: input, shape index: {}]
  %s2 = inlined_call_operand.vmem [shape: f32[1152,1], index: 2, kind: input, shape index: {}]
  %s3 = inlined_call_operand.vmem [shape: bf16[128,512], index: 3, kind: input, shape index: {}]
  %s4 = inlined_call_operand.vmem [shape: bf16[256,128], index: 4, kind: input, shape index: {}]
  %s5 = inlined_call_operand.vmem [shape: bf16[8,128,512], index: 5, kind: input, shape index: {}]
  %s6 = inlined_call_operand.vmem [shape: bf16[8,256,128], index: 6, kind: input, shape index: {}]
  %s7 = inlined_call_operand.vmem [shape: bf16[1152,128], index: 7, kind: output, shape index: {}]
  %s8 = sld [smem:[#allocation0]]
  $region141: #{llama4_moe_forward.1} parent=0
    _
  %s10 = ssub.s32 1, %s8
  %s11 = scalar_select 0, %s10, %s8
  %s13 = sshll.u32 %s0, 4
  %s14 = int_to_ptr.vmem [resolvable:$true] %s13
  %16 = dma.vmem_to_smem %s14, 16, [#allocation4], [#allocation3]
  %18 = dma.done [#allocation3], 16
  %19 = sfence
  $region1: #{llama4_moe_forward.1} parent=0
    #allocation5 [shape = 'u8[131072]{0}', space=vmem, size = 0x20000, scoped, tag = 'input window, operand 3']
    #allocation6 [shape = 'u8[131072]{0}', space=vmem, size = 0x20000, scoped, tag = 'input window, operand 5']
    loop: start=0, step=1, limit=20
    $region2: #{llama4_moe_forward.1} parent=1 // loop_pre_header
      _
    $region3: #{llama4_moe_forward.1} parent=1 // loop_header
      %s21 = sphi 0, %s25
      %p22 = scmp.ge.s32.totalorder %s21, 20
      %s28 = sphi 0, %s40
      %s29 = sphi 0, %s36
      %s30 = sphi 0, %s28
      %s31 = sphi 0, %s29
      %s32 = sphi 0, %s30
      %s33 = sphi 0, %s31
      %s43 = sphi 0, %s45
      %s46 = sphi 0, %s43
      %s47 = sphi 0, %s46
      %s63 = sphi 0, %s47
      %s69 = sphi 0, %s71
      %s72 = sphi 0, %s69
      %s73 = sphi 0, %s72
      %s89 = sphi 0, %s73
      %s95 = sphi 0, %s97
      %s98 = sphi 0, %s95
      %s99 = sphi 0, %s98
      %s115 = sphi 0, %s99
      %s121 = sphi 0, %s123
      %s124 = sphi 0, %s121
      %s125 = sphi 0, %s124
      %s141 = sphi 0, %s125
      %s151 = sphi 0, %s153
      %s154 = sphi 0, %s151
      %s155 = sphi 0, %s154
      %s171 = sphi 0, %s155
      %s181 = sphi 0, %s183
      %s184 = sphi 0, %s181
      %s185 = sphi 0, %s184
      %s201 = sphi 0, %s185
      %s207 = sphi 0, %s209
      %s210 = sphi 0, %s207
      %s211 = sphi 0, %s210
      %s227 = sphi 0, %s211
    $region4: #{llama4_moe_forward.1} parent=1 // loop_header_branch
      %24 = sbr.rel (%p22) target = $region8
    $region5: #{llama4_moe_forward.1} parent=1 // loop_body
      %s26 = ssub.s32 %s21, 1
      %s27 = ssub.s32 %s21, 2
      %s34 = sadd.s32 1, %s29
      %p35 = scmp.ge.s32.totalorder %s34, 2
      %s36 = scalar_select %p35, 0, %s34
      %s37 = sadd.s32 1, %s28
      %s38 = scalar_select %p35, %s37, %s28
      %p39 = scmp.ge.s32.totalorder %s38, 9
      %s40 = scalar_select %p39, 0, %s38
      %s41 = ssub.s32 %s28, %s40
      %p42 = scmp.eq.s32.totalorder %s41, 0
      %s44 = sadd.s32 %s43, 1
      %s45 = scalar_select %p42, %s43, %s44
      %p48 = pneg %p42
      %p49 = scmp.eq.s32.totalorder %s21, 17
      %p50 = por %p48, %p49
      %p51 = scmp.ne.s32.totalorder %s43, %s46
      %p52 = scmp.eq.s32.totalorder %s21, 0
      %p53 = por %p51, %p52
      %p54 = scmp.ne.s32.totalorder %s43, %s46
      %p55 = scmp.eq.s32.totalorder %s26, 17
      %p56 = por %p54, %p55
      %p57 = scmp.ne.s32.totalorder %s46, %s47
      %p58 = scmp.eq.s32.totalorder %s26, 0
      %p59 = por %p57, %p58
      %p60 = scmp.ne.s32.totalorder %s46, %s47
      %p61 = scmp.eq.s32.totalorder %s27, 17
      %p62 = por %p60, %p61
      %p64 = scmp.ne.s32.totalorder %s47, %s63
      %p65 = scmp.eq.s32.totalorder %s27, 0
      %p66 = por %p64, %p65
      %s67 = ssub.s32 %s28, %s40
      %p68 = scmp.eq.s32.totalorder %s67, 0
      %s70 = sadd.s32 %s69, 1
      %s71 = scalar_select %p68, %s69, %s70
      %p74 = pneg %p68
      %p75 = scmp.eq.s32.totalorder %s21, 17
      %p76 = por %p74, %p75
      %p77 = scmp.ne.s32.totalorder %s69, %s72
      %p78 = scmp.eq.s32.totalorder %s21, 0
      %p79 = por %p77, %p78
      %p80 = scmp.ne.s32.totalorder %s69, %s72
      %p81 = scmp.eq.s32.totalorder %s26, 17
      %p82 = por %p80, %p81
      %p83 = scmp.ne.s32.totalorder %s72, %s73
      %p84 = scmp.eq.s32.totalorder %s26, 0
      %p85 = por %p83, %p84
      %p86 = scmp.ne.s32.totalorder %s72, %s73
      %p87 = scmp.eq.s32.totalorder %s27, 17
      %p88 = por %p86, %p87
      %p90 = scmp.ne.s32.totalorder %s73, %s89
      %p91 = scmp.eq.s32.totalorder %s27, 0
      %p92 = por %p90, %p91
      %s93 = ssub.s32 %s29, %s36
      %p94 = scmp.eq.s32.totalorder %s93, 0
      %s96 = sadd.s32 %s95, 1
      %s97 = scalar_select %p94, %s95, %s96
      %p100 = pneg %p94
      %p101 = scmp.eq.s32.totalorder %s21, 17
      %p102 = por %p100, %p101
      %p103 = scmp.ne.s32.totalorder %s95, %s98
      %p104 = scmp.eq.s32.totalorder %s21, 0
      %p105 = por %p103, %p104
      %p106 = scmp.ne.s32.totalorder %s95, %s98
      %p107 = scmp.eq.s32.totalorder %s26, 17
      %p108 = por %p106, %p107
      %p109 = scmp.ne.s32.totalorder %s98, %s99
      %p110 = scmp.eq.s32.totalorder %s26, 0
      %p111 = por %p109, %p110
      %p112 = scmp.ne.s32.totalorder %s98, %s99
      %p113 = scmp.eq.s32.totalorder %s27, 17
      %p114 = por %p112, %p113
      %p116 = scmp.ne.s32.totalorder %s99, %s115
      %p117 = scmp.eq.s32.totalorder %s27, 0
      %p118 = por %p116, %p117
      %s119 = ssub.s32 %s29, %s36
      %p120 = scmp.eq.s32.totalorder %s119, 0
      %s122 = sadd.s32 %s121, 1
      %s123 = scalar_select %p120, %s121, %s122
      %p126 = pneg %p120
      %p127 = scmp.eq.s32.totalorder %s21, 17
      %p128 = por %p126, %p127
      %p129 = scmp.ne.s32.totalorder %s121, %s124
      %p130 = scmp.eq.s32.totalorder %s21, 0
      %p131 = por %p129, %p130
      %p132 = scmp.ne.s32.totalorder %s121, %s124
      %p133 = scmp.eq.s32.totalorder %s26, 17
      %p134 = por %p132, %p133
      %p135 = scmp.ne.s32.totalorder %s124, %s125
      %p136 = scmp.eq.s32.totalorder %s26, 0
      %p137 = por %p135, %p136
      %p138 = scmp.ne.s32.totalorder %s124, %s125
      %p139 = scmp.eq.s32.totalorder %s27, 17
      %p140 = por %p138, %p139
      %p142 = scmp.ne.s32.totalorder %s125, %s141
      %p143 = scmp.eq.s32.totalorder %s27, 0
      %p144 = por %p142, %p143
      %s145 = sld [smem:[#allocation4 + %s28]]
      %s146 = sld [smem:[#allocation4 + %s40]]
      %s147 = ssub.s32 %s145, %s146
      %s148 = ssub.s32 %s29, %s36
      %s149 = sor.u32 %s147, %s148
      %p150 = scmp.eq.s32.totalorder %s149, 0
      %s152 = sadd.s32 %s151, 1
      %s153 = scalar_select %p150, %s151, %s152
      %p156 = pneg %p150
      %p157 = scmp.eq.s32.totalorder %s21, 17
      %p158 = por %p156, %p157
      %p159 = scmp.ne.s32.totalorder %s151, %s154
      %p160 = scmp.eq.s32.totalorder %s21, 0
      %p161 = por %p159, %p160
      %p162 = scmp.ne.s32.totalorder %s151, %s154
      %p163 = scmp.eq.s32.totalorder %s26, 17
      %p164 = por %p162, %p163
      %p165 = scmp.ne.s32.totalorder %s154, %s155
      %p166 = scmp.eq.s32.totalorder %s26, 0
      %p167 = por %p165, %p166
      %p168 = scmp.ne.s32.totalorder %s154, %s155
      %p169 = scmp.eq.s32.totalorder %s27, 17
      %p170 = por %p168, %p169
      %p172 = scmp.ne.s32.totalorder %s155, %s171
      %p173 = scmp.eq.s32.totalorder %s27, 0
      %p174 = por %p172, %p173
      %s175 = sld [smem:[#allocation4 + %s28]]
      %s176 = sld [smem:[#allocation4 + %s40]]
      %s177 = ssub.s32 %s175, %s176
      %s178 = ssub.s32 %s29, %s36
      %s179 = sor.u32 %s177, %s178
      %p180 = scmp.eq.s32.totalorder %s179, 0
      %s182 = sadd.s32 %s181, 1
      %s183 = scalar_select %p180, %s181, %s182
      %p186 = pneg %p180
      %p187 = scmp.eq.s32.totalorder %s21, 17
      %p188 = por %p186, %p187
      %p189 = scmp.ne.s32.totalorder %s181, %s184
      %p190 = scmp.eq.s32.totalorder %s21, 0
      %p191 = por %p189, %p190
      %p192 = scmp.ne.s32.totalorder %s181, %s184
      %p193 = scmp.eq.s32.totalorder %s26, 17
      %p194 = por %p192, %p193
      %p195 = scmp.ne.s32.totalorder %s184, %s185
      %p196 = scmp.eq.s32.totalorder %s26, 0
      %p197 = por %p195, %p196
      %p198 = scmp.ne.s32.totalorder %s184, %s185
      %p199 = scmp.eq.s32.totalorder %s27, 17
      %p200 = por %p198, %p199
      %p202 = scmp.ne.s32.totalorder %s185, %s201
      %p203 = scmp.eq.s32.totalorder %s27, 0
      %p204 = por %p202, %p203
      %s205 = ssub.s32 %s28, %s40
      %p206 = scmp.eq.s32.totalorder %s205, 0
      %s208 = sadd.s32 %s207, 1
      %s209 = scalar_select %p206, %s207, %s208
      %p212 = pneg %p206
      %p213 = scmp.eq.s32.totalorder %s21, 17
      %p214 = por %p212, %p213
      %p215 = scmp.ne.s32.totalorder %s207, %s210
      %p216 = scmp.eq.s32.totalorder %s21, 0
      %p217 = por %p215, %p216
      %p218 = scmp.ne.s32.totalorder %s207, %s210
      %p219 = scmp.eq.s32.totalorder %s26, 17
      %p220 = por %p218, %p219
      %p221 = scmp.ne.s32.totalorder %s210, %s211
      %p222 = scmp.eq.s32.totalorder %s26, 0
      %p223 = por %p221, %p222
      %p224 = scmp.ne.s32.totalorder %s210, %s211
      %p225 = scmp.eq.s32.totalorder %s27, 17
      %p226 = por %p224, %p225
      %p228 = scmp.ne.s32.totalorder %s211, %s227
      %p229 = scmp.eq.s32.totalorder %s27, 0
      %p230 = por %p228, %p229
      %p231 = scmp.le.s32.totalorder 1, %s21
      %p232 = scmp.lt.s32.totalorder %s21, 19
      %p233 = pnand %p231, %p232
      %p234 = pneg %p233
      // Predicated region
      $region9: #{llama4_moe_forward.1} parent=5 // pred_check
        _
      $region10: #{llama4_moe_forward.1} parent=5 // pred_check_branch
        %236 = sbr.rel (%p233) target = $region12
      $region11: #{llama4_moe_forward.1} parent=5 // pred_region
        %s237 = ssub.s32 %s21, 1
      $region12: #{llama4_moe_forward.1} parent=5 // pred_fallthru
        _
      %p238 = scmp.lt.s32.totalorder %s21, 18
      // Predicated region
      $region13: #{llama4_moe_forward.1} parent=5 // pred_check
        %p239 = pneg %p238
      $region14: #{llama4_moe_forward.1} parent=5 // pred_check_branch
        %241 = sbr.rel (%p239) target = $region16
      $region15: #{llama4_moe_forward.1} parent=5 // pred_region
        // Predicated region
        $region17: #{llama4_moe_forward.1} parent=15 // pred_check
          %p242 = pneg %p53
        $region18: #{llama4_moe_forward.1} parent=15 // pred_check_branch
          %244 = sbr.rel (%p242) target = $region20
        $region19: #{llama4_moe_forward.1} parent=15 // pred_region
          %s245 = smul.u32 16, %s28
          %p246 = scmp.lt.s32.totalorder %s245, 143
          %s247 = scalar_select %p246, %s245, 143
          %s248 = smul.addr %s247, 4
          %s249 = scalar_lea.vmem %s1, %s248
          %s250 = smul.u32 16, %s28
        $region20: #{llama4_moe_forward.1} parent=15 // pred_fallthru
          _
        // Predicated region
        $region21: #{llama4_moe_forward.1} parent=15 // pred_check
          %p251 = pneg %p79
        $region22: #{llama4_moe_forward.1} parent=15 // pred_check_branch
          %253 = sbr.rel (%p251) target = $region24
        $region23: #{llama4_moe_forward.1} parent=15 // pred_region
          %s254 = smul.u32 16, %s28
          %p255 = scmp.lt.s32.totalorder %s254, 143
          %s256 = scalar_select %p255, %s254, 143
          %s257 = smul.addr %s256, 8
          %s258 = scalar_lea.vmem %s2, %s257
          %s259 = smul.u32 16, %s28
        $region24: #{llama4_moe_forward.1} parent=15 // pred_fallthru
          _
        // Predicated region
        $region25: #{llama4_moe_forward.1} parent=15 // pred_check
          %p260 = pneg %p105
        $region26: #{llama4_moe_forward.1} parent=15 // pred_check_branch
          %262 = sbr.rel (%p260) target = $region28
        $region27: #{llama4_moe_forward.1} parent=15 // pred_region
          %s263 = sand.u32 %s95, 1
          %s264 = sand.u32 %s95, 1
          %s265 = smul.addr %s264, 128
          %s266 = scalar_lea.vmem [#allocation5], %s265
          %s267 = smul.u32 2, %s29
          %s268 = smul.addr %s267, 4
          %s269 = scalar_lea.vmem %s3, %s268
          // Predicated region
          $region29: #{llama4_moe_forward.1} parent=27 // pred_check
            _
          $region30: #{llama4_moe_forward.1} parent=27 // pred_check_branch
            %271 = sbr.rel (0) target = $region32
          $region31: #{llama4_moe_forward.1} parent=27 // pred_region
            // Predicated region
            $region33: #{llama4_moe_forward.1} parent=31 // pred_check
              _
            $region34: #{llama4_moe_forward.1} parent=31 // pred_check_branch
              %273 = sbr.rel (0) target = $region36
            $region35: #{llama4_moe_forward.1} parent=31 // pred_region
              // Predicated region
              $region48: #{llama4_moe_forward.1} parent=35 // pred_check
                _
              $region49: #{llama4_moe_forward.1} parent=35 // pred_check_branch
                %319 = sbr.rel (0) target = $region51
              $region50: #{llama4_moe_forward.1} parent=35 // pred_region
                loop: start=0, step=1, limit=1
                $region52: #{llama4_moe_forward.1} parent=50 // loop_pre_header
                  _
                $region53: #{llama4_moe_forward.1} parent=50 // loop_header
                  %s321 = sphi 0, %s325
                  %p322 = scmp.ge.s32.totalorder %s321, 1
                  %s326 = sphi %s269, %s269
                  %s327 = sphi %s266, %s266
                $region54: #{llama4_moe_forward.1} parent=50 // loop_header_branch
                  %324 = sbr.rel (%p322) target = $region58
                $region55: #{llama4_moe_forward.1} parent=50 // loop_body
                  %v328 = vld [vmem:[%s326] sm:$0xff]
                  %329 = vst [vmem:[%s327] sm:$0xff] %v328
                  %v330 = vld [vmem:[%s326 + $0x10] sm:$0xff]
                  %331 = vst [vmem:[%s327 + $0x8] sm:$0xff] %v330
                  %v332 = vld [vmem:[%s326 + $0x20] sm:$0xff]
                  %333 = vst [vmem:[%s327 + $0x10] sm:$0xff] %v332
                  %v334 = vld [vmem:[%s326 + $0x30] sm:$0xff]
                  %335 = vst [vmem:[%s327 + $0x18] sm:$0xff] %v334
                  %v336 = vld [vmem:[%s326 + $0x40] sm:$0xff]
                  %337 = vst [vmem:[%s327 + $0x20] sm:$0xff] %v336
                  %v338 = vld [vmem:[%s326 + $0x50] sm:$0xff]
                  %339 = vst [vmem:[%s327 + $0x28] sm:$0xff] %v338
                  %v340 = vld [vmem:[%s326 + $0x60] sm:$0xff]
                  %341 = vst [vmem:[%s327 + $0x30] sm:$0xff] %v340
                  %v342 = vld [vmem:[%s326 + $0x70] sm:$0xff]
                  %343 = vst [vmem:[%s327 + $0x38] sm:$0xff] %v342
                  %v344 = vld [vmem:[%s326 + $0x80] sm:$0xff]
                  %345 = vst [vmem:[%s327 + $0x40] sm:$0xff] %v344
                  %v346 = vld [vmem:[%s326 + $0x90] sm:$0xff]
                  %347 = vst [vmem:[%s327 + $0x48] sm:$0xff] %v346
                  %v348 = vld [vmem:[%s326 + $0xa0] sm:$0xff]
                  %349 = vst [vmem:[%s327 + $0x50] sm:$0xff] %v348
                  %v350 = vld [vmem:[%s326 + $0xb0] sm:$0xff]
                  %351 = vst [vmem:[%s327 + $0x58] sm:$0xff] %v350
                  %v352 = vld [vmem:[%s326 + $0xc0] sm:$0xff]
                  %353 = vst [vmem:[%s327 + $0x60] sm:$0xff] %v352
                  %v354 = vld [vmem:[%s326 + $0xd0] sm:$0xff]
                  %355 = vst [vmem:[%s327 + $0x68] sm:$0xff] %v354
                  %v356 = vld [vmem:[%s326 + $0xe0] sm:$0xff]
                  %357 = vst [vmem:[%s327 + $0x70] sm:$0xff] %v356
                  %v358 = vld [vmem:[%s326 + $0xf0] sm:$0xff]
                  %359 = vst [vmem:[%s327 + $0x78] sm:$0xff] %v358
                $region56: #{llama4_moe_forward.1} parent=50 // loop_footer
                  %s325 = sadd.s32 1, %s321
                $region57: #{llama4_moe_forward.1} parent=50 // loop_footer_branch
                  %320 = sbr.rel target = $region53
                $region58: #{llama4_moe_forward.1} parent=50 // loop_exit
                  _
              $region51: #{llama4_moe_forward.1} parent=35 // pred_fallthru
                _
              // Predicated region
              $region59: #{llama4_moe_forward.1} parent=35 // pred_check
                _
              $region60: #{llama4_moe_forward.1} parent=35 // pred_check_branch
                %361 = sbr.rel target = $region62
              $region61: #{llama4_moe_forward.1} parent=35 // pred_region
                _
              $region62: #{llama4_moe_forward.1} parent=35 // pred_fallthru
                _
            $region36: #{llama4_moe_forward.1} parent=31 // pred_fallthru
              _
            // Predicated region
            $region37: #{llama4_moe_forward.1} parent=31 // pred_check
              _
            $region38: #{llama4_moe_forward.1} parent=31 // pred_check_branch
              %275 = sbr.rel target = $region40
            $region39: #{llama4_moe_forward.1} parent=31 // pred_region
              %s277 = ssub.s32 256, 1
              loop: start=0, step=1, limit=1
              $region41: #{llama4_moe_forward.1} parent=39 // loop_pre_header
                _
              $region42: #{llama4_moe_forward.1} parent=39 // loop_header
                %s279 = sphi 0, %s283
                %p280 = scmp.ge.s32.totalorder %s279, 1
                %s284 = sphi %s269, %s269
                %s285 = sphi %s266, %s266
              $region43: #{llama4_moe_forward.1} parent=39 // loop_header_branch
                %282 = sbr.rel (%p280) target = $region47
              $region44: #{llama4_moe_forward.1} parent=39 // loop_body
                %v286 = vld [vmem:[%s284] sm:%s277]
                %287 = vst [vmem:[%s285] sm:%s277] %v286
                %v288 = vld [vmem:[%s284 + $0x10] sm:%s277]
                %289 = vst [vmem:[%s285 + $0x8] sm:%s277] %v288
                %v290 = vld [vmem:[%s284 + $0x20] sm:%s277]
                %291 = vst [vmem:[%s285 + $0x10] sm:%s277] %v290
                %v292 = vld [vmem:[%s284 + $0x30] sm:%s277]
                %293 = vst [vmem:[%s285 + $0x18] sm:%s277] %v292
                %v294 = vld [vmem:[%s284 + $0x40] sm:%s277]
                %295 = vst [vmem:[%s285 + $0x20] sm:%s277] %v294
                %v296 = vld [vmem:[%s284 + $0x50] sm:%s277]
                %297 = vst [vmem:[%s285 + $0x28] sm:%s277] %v296
                %v298 = vld [vmem:[%s284 + $0x60] sm:%s277]
                %299 = vst [vmem:[%s285 + $0x30] sm:%s277] %v298
                %v300 = vld [vmem:[%s284 + $0x70] sm:%s277]
                %301 = vst [vmem:[%s285 + $0x38] sm:%s277] %v300
                %v302 = vld [vmem:[%s284 + $0x80] sm:%s277]
                %303 = vst [vmem:[%s285 + $0x40] sm:%s277] %v302
                %v304 = vld [vmem:[%s284 + $0x90] sm:%s277]
                %305 = vst [vmem:[%s285 + $0x48] sm:%s277] %v304
                %v306 = vld [vmem:[%s284 + $0xa0] sm:%s277]
                %307 = vst [vmem:[%s285 + $0x50] sm:%s277] %v306
                %v308 = vld [vmem:[%s284 + $0xb0] sm:%s277]
                %309 = vst [vmem:[%s285 + $0x58] sm:%s277] %v308
                %v310 = vld [vmem:[%s284 + $0xc0] sm:%s277]
                %311 = vst [vmem:[%s285 + $0x60] sm:%s277] %v310
                %v312 = vld [vmem:[%s284 + $0xd0] sm:%s277]
                %313 = vst [vmem:[%s285 + $0x68] sm:%s277] %v312
                %v314 = vld [vmem:[%s284 + $0xe0] sm:%s277]
                %315 = vst [vmem:[%s285 + $0x70] sm:%s277] %v314
                %v316 = vld [vmem:[%s284 + $0xf0] sm:%s277]
                %317 = vst [vmem:[%s285 + $0x78] sm:%s277] %v316
              $region45: #{llama4_moe_forward.1} parent=39 // loop_footer
                %s283 = sadd.s32 1, %s279
              $region46: #{llama4_moe_forward.1} parent=39 // loop_footer_branch
                %278 = sbr.rel target = $region42
              $region47: #{llama4_moe_forward.1} parent=39 // loop_exit
                _
            $region40: #{llama4_moe_forward.1} parent=31 // pred_fallthru
              _
          $region32: #{llama4_moe_forward.1} parent=27 // pred_fallthru
            _
          %362 = vnop
        $region28: #{llama4_moe_forward.1} parent=15 // pred_fallthru
          _
        // Predicated region
        $region63: #{llama4_moe_forward.1} parent=15 // pred_check
          %p363 = pneg %p131
        $region64: #{llama4_moe_forward.1} parent=15 // pred_check_branch
          %365 = sbr.rel (%p363) target = $region66
        $region65: #{llama4_moe_forward.1} parent=15 // pred_region
          %s366 = smul.u32 16, %s29
          %p367 = scmp.lt.s32.totalorder %s366, 31
          %s368 = scalar_select %p367, %s366, 31
          %s369 = smul.addr %s368, 4
          %s370 = scalar_lea.vmem %s4, %s369
          %s371 = smul.u32 16, %s29
        $region66: #{llama4_moe_forward.1} parent=15 // pred_fallthru
          _
        // Predicated region
        $region67: #{llama4_moe_forward.1} parent=15 // pred_check
          %p372 = pneg %p161
        $region68: #{llama4_moe_forward.1} parent=15 // pred_check_branch
          %374 = sbr.rel (%p372) target = $region70
        $region69: #{llama4_moe_forward.1} parent=15 // pred_region
          %s375 = sand.u32 %s151, 1
          %s376 = sand.u32 %s151, 1
          %s377 = smul.addr %s376, 128
          %s378 = scalar_lea.vmem [#allocation6], %s377
          %s379 = sld [smem:[#allocation4 + %s28]]
          %s380 = smul.u32 2, %s29
          %s381 = smul.addr %s379, 64
          %s382 = sadd.s32 %s380, %s381
          %s383 = smul.addr %s382, 4
          %s384 = scalar_lea.vmem %s5, %s383
          // Predicated region
          $region71: #{llama4_moe_forward.1} parent=69 // pred_check
            _
          $region72: #{llama4_moe_forward.1} parent=69 // pred_check_branch
            %386 = sbr.rel (0) target = $region74
          $region73: #{llama4_moe_forward.1} parent=69 // pred_region
            // Predicated region
            $region75: #{llama4_moe_forward.1} parent=73 // pred_check
              _
            $region76: #{llama4_moe_forward.1} parent=73 // pred_check_branch
              %388 = sbr.rel (0) target = $region78
            $region77: #{llama4_moe_forward.1} parent=73 // pred_region
              // Predicated region
              $region90: #{llama4_moe_forward.1} parent=77 // pred_check
                _
              $region91: #{llama4_moe_forward.1} parent=77 // pred_check_branch
                %434 = sbr.rel (0) target = $region93
              $region92: #{llama4_moe_forward.1} parent=77 // pred_region
                loop: start=0, step=1, limit=1
                $region94: #{llama4_moe_forward.1} parent=92 // loop_pre_header
                  _
                $region95: #{llama4_moe_forward.1} parent=92 // loop_header
                  %s436 = sphi 0, %s440
                  %p437 = scmp.ge.s32.totalorder %s436, 1
                  %s441 = sphi %s384, %s384
                  %s442 = sphi %s378, %s378
                $region96: #{llama4_moe_forward.1} parent=92 // loop_header_branch
                  %439 = sbr.rel (%p437) target = $region100
                $region97: #{llama4_moe_forward.1} parent=92 // loop_body
                  %v443 = vld [vmem:[%s441] sm:$0xff]
                  %444 = vst [vmem:[%s442] sm:$0xff] %v443
                  %v445 = vld [vmem:[%s441 + $0x10] sm:$0xff]
                  %446 = vst [vmem:[%s442 + $0x8] sm:$0xff] %v445
                  %v447 = vld [vmem:[%s441 + $0x20] sm:$0xff]
                  %448 = vst [vmem:[%s442 + $0x10] sm:$0xff] %v447
                  %v449 = vld [vmem:[%s441 + $0x30] sm:$0xff]
                  %450 = vst [vmem:[%s442 + $0x18] sm:$0xff] %v449
                  %v451 = vld [vmem:[%s441 + $0x40] sm:$0xff]
                  %452 = vst [vmem:[%s442 + $0x20] sm:$0xff] %v451
                  %v453 = vld [vmem:[%s441 + $0x50] sm:$0xff]
                  %454 = vst [vmem:[%s442 + $0x28] sm:$0xff] %v453
                  %v455 = vld [vmem:[%s441 + $0x60] sm:$0xff]
                  %456 = vst [vmem:[%s442 + $0x30] sm:$0xff] %v455
                  %v457 = vld [vmem:[%s441 + $0x70] sm:$0xff]
                  %458 = vst [vmem:[%s442 + $0x38] sm:$0xff] %v457
                  %v459 = vld [vmem:[%s441 + $0x80] sm:$0xff]
                  %460 = vst [vmem:[%s442 + $0x40] sm:$0xff] %v459
                  %v461 = vld [vmem:[%s441 + $0x90] sm:$0xff]
                  %462 = vst [vmem:[%s442 + $0x48] sm:$0xff] %v461
                  %v463 = vld [vmem:[%s441 + $0xa0] sm:$0xff]
                  %464 = vst [vmem:[%s442 + $0x50] sm:$0xff] %v463
                  %v465 = vld [vmem:[%s441 + $0xb0] sm:$0xff]
                  %466 = vst [vmem:[%s442 + $0x58] sm:$0xff] %v465
                  %v467 = vld [vmem:[%s441 + $0xc0] sm:$0xff]
                  %468 = vst [vmem:[%s442 + $0x60] sm:$0xff] %v467
                  %v469 = vld [vmem:[%s441 + $0xd0] sm:$0xff]
                  %470 = vst [vmem:[%s442 + $0x68] sm:$0xff] %v469
                  %v471 = vld [vmem:[%s441 + $0xe0] sm:$0xff]
                  %472 = vst [vmem:[%s442 + $0x70] sm:$0xff] %v471
                  %v473 = vld [vmem:[%s441 + $0xf0] sm:$0xff]
                  %474 = vst [vmem:[%s442 + $0x78] sm:$0xff] %v473
                $region98: #{llama4_moe_forward.1} parent=92 // loop_footer
                  %s440 = sadd.s32 1, %s436
                $region99: #{llama4_moe_forward.1} parent=92 // loop_footer_branch
                  %435 = sbr.rel target = $region95
                $region100: #{llama4_moe_forward.1} parent=92 // loop_exit
                  _
              $region93: #{llama4_moe_forward.1} parent=77 // pred_fallthru
                _
              // Predicated region
              $region101: #{llama4_moe_forward.1} parent=77 // pred_check
                _
              $region102: #{llama4_moe_forward.1} parent=77 // pred_check_branch
                %476 = sbr.rel target = $region104
              $region103: #{llama4_moe_forward.1} parent=77 // pred_region
                _
              $region104: #{llama4_moe_forward.1} parent=77 // pred_fallthru
                _
            $region78: #{llama4_moe_forward.1} parent=73 // pred_fallthru
              _
            // Predicated region
            $region79: #{llama4_moe_forward.1} parent=73 // pred_check
              _
            $region80: #{llama4_moe_forward.1} parent=73 // pred_check_branch
              %390 = sbr.rel target = $region82
            $region81: #{llama4_moe_forward.1} parent=73 // pred_region
              %s392 = ssub.s32 256, 1
              loop: start=0, step=1, limit=1
              $region83: #{llama4_moe_forward.1} parent=81 // loop_pre_header
                _
              $region84: #{llama4_moe_forward.1} parent=81 // loop_header
                %s394 = sphi 0, %s398
                %p395 = scmp.ge.s32.totalorder %s394, 1
                %s399 = sphi %s384, %s384
                %s400 = sphi %s378, %s378
              $region85: #{llama4_moe_forward.1} parent=81 // loop_header_branch
                %397 = sbr.rel (%p395) target = $region89
              $region86: #{llama4_moe_forward.1} parent=81 // loop_body
                %v401 = vld [vmem:[%s399] sm:%s392]
                %402 = vst [vmem:[%s400] sm:%s392] %v401
                %v403 = vld [vmem:[%s399 + $0x10] sm:%s392]
                %404 = vst [vmem:[%s400 + $0x8] sm:%s392] %v403
                %v405 = vld [vmem:[%s399 + $0x20] sm:%s392]
                %406 = vst [vmem:[%s400 + $0x10] sm:%s392] %v405
                %v407 = vld [vmem:[%s399 + $0x30] sm:%s392]
                %408 = vst [vmem:[%s400 + $0x18] sm:%s392] %v407
                %v409 = vld [vmem:[%s399 + $0x40] sm:%s392]
                %410 = vst [vmem:[%s400 + $0x20] sm:%s392] %v409
                %v411 = vld [vmem:[%s399 + $0x50] sm:%s392]
                %412 = vst [vmem:[%s400 + $0x28] sm:%s392] %v411
                %v413 = vld [vmem:[%s399 + $0x60] sm:%s392]
                %414 = vst [vmem:[%s400 + $0x30] sm:%s392] %v413
                %v415 = vld [vmem:[%s399 + $0x70] sm:%s392]
                %416 = vst [vmem:[%s400 + $0x38] sm:%s392] %v415
                %v417 = vld [vmem:[%s399 + $0x80] sm:%s392]
                %418 = vst [vmem:[%s400 + $0x40] sm:%s392] %v417
                %v419 = vld [vmem:[%s399 + $0x90] sm:%s392]
                %420 = vst [vmem:[%s400 + $0x48] sm:%s392] %v419
                %v421 = vld [vmem:[%s399 + $0xa0] sm:%s392]
                %422 = vst [vmem:[%s400 + $0x50] sm:%s392] %v421
                %v423 = vld [vmem:[%s399 + $0xb0] sm:%s392]
                %424 = vst [vmem:[%s400 + $0x58] sm:%s392] %v423
                %v425 = vld [vmem:[%s399 + $0xc0] sm:%s392]
                %426 = vst [vmem:[%s400 + $0x60] sm:%s392] %v425
                %v427 = vld [vmem:[%s399 + $0xd0] sm:%s392]
                %428 = vst [vmem:[%s400 + $0x68] sm:%s392] %v427
                %v429 = vld [vmem:[%s399 + $0xe0] sm:%s392]
                %430 = vst [vmem:[%s400 + $0x70] sm:%s392] %v429
                %v431 = vld [vmem:[%s399 + $0xf0] sm:%s392]
                %432 = vst [vmem:[%s400 + $0x78] sm:%s392] %v431
              $region87: #{llama4_moe_forward.1} parent=81 // loop_footer
                %s398 = sadd.s32 1, %s394
              $region88: #{llama4_moe_forward.1} parent=81 // loop_footer_branch
                %393 = sbr.rel target = $region84
              $region89: #{llama4_moe_forward.1} parent=81 // loop_exit
                _
            $region82: #{llama4_moe_forward.1} parent=73 // pred_fallthru
              _
          $region74: #{llama4_moe_forward.1} parent=69 // pred_fallthru
            _
          %477 = vnop
        $region70: #{llama4_moe_forward.1} parent=15 // pred_fallthru
          _
        // Predicated region
        $region105: #{llama4_moe_forward.1} parent=15 // pred_check
          %p478 = pneg %p191
        $region106: #{llama4_moe_forward.1} parent=15 // pred_check_branch
          %480 = sbr.rel (%p478) target = $region108
        $region107: #{llama4_moe_forward.1} parent=15 // pred_region
          %s481 = sld [smem:[#allocation4 + %s28]]
          %s482 = smul.u32 16, %s29
          %p483 = scmp.lt.s32.totalorder %s481, 7
          %s484 = scalar_select %p483, %s481, 7
          %p485 = scmp.lt.s32.totalorder %s482, 31
          %s486 = scalar_select %p485, %s482, 31
          %s487 = smul.addr %s484, 32
          %s488 = sadd.s32 %s486, %s487
          %s489 = smul.addr %s488, 4
          %s490 = scalar_lea.vmem %s6, %s489
          %s491 = sld [smem:[#allocation4 + %s28]]
          %s492 = smul.u32 16, %s29
        $region108: #{llama4_moe_forward.1} parent=15 // pred_fallthru
          _
      $region16: #{llama4_moe_forward.1} parent=5 // pred_fallthru
        _
      %p493 = scmp.le.s32.totalorder 1, %s21
      %p494 = scmp.lt.s32.totalorder %s21, 19
      %p495 = pnand %p493, %p494
      %p496 = pneg %p495
      // Predicated region
      $region109: #{llama4_moe_forward.1} parent=5 // pred_check
        _
      $region110: #{llama4_moe_forward.1} parent=5 // pred_check_branch
        %498 = sbr.rel (%p495) target = $region112
      $region111: #{llama4_moe_forward.1} parent=5 // pred_region
        %s499 = ssub.s32 %s21, 1
        %s500 = sand.u32 %s98, 1
        %s501 = sand.u32 %s98, 1
        %s502 = smul.addr %s501, 128
        %s503 = scalar_lea.vmem [#allocation5], %s502
        // Predicated region
        $region113: #{llama4_moe_forward.1} parent=111 // pred_check
          %p504 = pneg %p111
        $region114: #{llama4_moe_forward.1} parent=111 // pred_check_branch
          %506 = sbr.rel (%p504) target = $region116
        $region115: #{llama4_moe_forward.1} parent=111 // pred_region
          _
        $region116: #{llama4_moe_forward.1} parent=111 // pred_fallthru
          _
        %s507 = sand.u32 %s154, 1
        %s508 = sand.u32 %s154, 1
        %s509 = smul.addr %s508, 128
        %s510 = scalar_lea.vmem [#allocation6], %s509
        // Predicated region
        $region117: #{llama4_moe_forward.1} parent=111 // pred_check
          %p511 = pneg %p167
        $region118: #{llama4_moe_forward.1} parent=111 // pred_check_branch
          %513 = sbr.rel (%p511) target = $region120
        $region119: #{llama4_moe_forward.1} parent=111 // pred_region
          _
        $region120: #{llama4_moe_forward.1} parent=111 // pred_fallthru
          _
        %s514 = smul.u32 16, %s30
        %p515 = scmp.lt.s32.totalorder %s514, 143
        %s516 = scalar_select %p515, %s514, 143
        %s517 = smul.addr %s516, 4
        %s518 = scalar_lea.vmem %s1, %s517
        %p519 = pneg %p59
        %p520 = pneg %p56
        %s521 = smul.u32 16, %s30
        %p522 = scmp.lt.s32.totalorder %s521, 143
        %s523 = scalar_select %p522, %s521, 143
        %s524 = smul.addr %s523, 8
        %s525 = scalar_lea.vmem %s2, %s524
        %p526 = pneg %p85
        %p527 = pneg %p82
        %s528 = sand.u32 %s98, 1
        %s529 = sand.u32 %s98, 1
        %s530 = smul.addr %s529, 128
        %s531 = scalar_lea.vmem [#allocation5], %s530
        %p532 = pneg %p111
        %p533 = pneg %p108
        %s534 = smul.u32 16, %s31
        %p535 = scmp.lt.s32.totalorder %s534, 31
        %s536 = scalar_select %p535, %s534, 31
        %s537 = smul.addr %s536, 4
        %s538 = scalar_lea.vmem %s4, %s537
        %p539 = pneg %p137
        %p540 = pneg %p134
        %s541 = sand.u32 %s154, 1
        %s542 = sand.u32 %s154, 1
        %s543 = smul.addr %s542, 128
        %s544 = scalar_lea.vmem [#allocation6], %s543
        %p545 = pneg %p167
        %p546 = pneg %p164
        %s547 = sld [smem:[#allocation4 + %s30]]
        %s548 = smul.u32 16, %s31
        %p549 = scmp.lt.s32.totalorder %s547, 7
        %s550 = scalar_select %p549, %s547, 7
        %p551 = scmp.lt.s32.totalorder %s548, 31
        %s552 = scalar_select %p551, %s548, 31
        %s553 = smul.addr %s550, 32
        %s554 = sadd.s32 %s552, %s553
        %s555 = smul.addr %s554, 4
        %s556 = scalar_lea.vmem %s6, %s555
        %p557 = pneg %p197
        %p558 = pneg %p194
        %p559 = pneg %p223
        %p560 = pneg %p220
        %s561 = smul.u32 16, %s30
        %p562 = scmp.lt.s32.totalorder %s561, 143
        %s563 = scalar_select %p562, %s561, 143
        %s564 = smul.addr %s563, 4
        %s565 = scalar_lea.vmem %s7, %s564
        %s566 = smul.u32 16, %s30
        %p567 = scmp.lt.s32.totalorder %s566, 143
        %s568 = scalar_select %p567, %s566, 143
        %s569 = smul.addr %s568, 4
        %s570 = scalar_lea.vmem %s1, %s569
        %s571 = smul.u32 16, %s30
        %s572 = smul.u32 16, %s30
        %p573 = scmp.lt.s32.totalorder %s572, 143
        %s574 = scalar_select %p573, %s572, 143
        %s575 = smul.addr %s574, 8
        %s576 = scalar_lea.vmem %s2, %s575
        %s577 = smul.u32 16, %s30
        %s578 = smul.u32 2, %s31
        %s579 = smul.u32 16, %s31
        %p580 = scmp.lt.s32.totalorder %s579, 31
        %s581 = scalar_select %p580, %s579, 31
        %s582 = smul.addr %s581, 4
        %s583 = scalar_lea.vmem %s4, %s582
        %s584 = smul.u32 16, %s31
        %s585 = sld [smem:[#allocation4 + %s30]]
        %s586 = smul.u32 2, %s31
        %s587 = sld [smem:[#allocation4 + %s30]]
        %s588 = smul.u32 16, %s31
        %p589 = scmp.lt.s32.totalorder %s587, 7
        %s590 = scalar_select %p589, %s587, 7
        %p591 = scmp.lt.s32.totalorder %s588, 31
        %s592 = scalar_select %p591, %s588, 31
        %s593 = smul.addr %s590, 32
        %s594 = sadd.s32 %s592, %s593
        %s595 = smul.addr %s594, 4
        %s596 = scalar_lea.vmem %s6, %s595
        %s597 = sld [smem:[#allocation4 + %s30]]
        %s598 = smul.u32 16, %s31
        %s599 = smul.u32 16, %s30
        %p600 = scmp.lt.s32.totalorder %s599, 143
        %s601 = scalar_select %p600, %s599, 143
        %s602 = smul.addr %s601, 4
        %s603 = scalar_lea.vmem %s7, %s602
        %s604 = smul.u32 16, %s30
        %p605 = scmp.eq.s32.totalorder %s31, 0
        // Predicated region
        $region121: #{llama4_moe_forward.1} parent=111 // pred_check
          %p606 = pneg %p605
        $region122: #{llama4_moe_forward.1} parent=111 // pred_check_branch
          %608 = sbr.rel (%p606) target = $region124
        $region123: #{llama4_moe_forward.1} parent=111 // pred_region
          %609 = vst [vmem:[#allocation2] sm:$0xff] 0.0
          %610 = vst [vmem:[#allocation2 + $0x8] sm:$0xff] 0.0
          %611 = vst [vmem:[#allocation2 + $0x10] sm:$0xff] 0.0
          %612 = vst [vmem:[#allocation2 + $0x18] sm:$0xff] 0.0
          %613 = vst [vmem:[#allocation2 + $0x20] sm:$0xff] 0.0
          %614 = vst [vmem:[#allocation2 + $0x28] sm:$0xff] 0.0
          %615 = vst [vmem:[#allocation2 + $0x30] sm:$0xff] 0.0
          %616 = vst [vmem:[#allocation2 + $0x38] sm:$0xff] 0.0
          %617 = vst [vmem:[#allocation2 + $0x40] sm:$0xff] 0.0
          %618 = vst [vmem:[#allocation2 + $0x48] sm:$0xff] 0.0
          %619 = vst [vmem:[#allocation2 + $0x50] sm:$0xff] 0.0
          %620 = vst [vmem:[#allocation2 + $0x58] sm:$0xff] 0.0
          %621 = vst [vmem:[#allocation2 + $0x60] sm:$0xff] 0.0
          %622 = vst [vmem:[#allocation2 + $0x68] sm:$0xff] 0.0
          %623 = vst [vmem:[#allocation2 + $0x70] sm:$0xff] 0.0
          %624 = vst [vmem:[#allocation2 + $0x78] sm:$0xff] 0.0
        $region124: #{llama4_moe_forward.1} parent=111 // pred_fallthru
          _
        %v625 = vld [vmem:[%s570] sm:$0xf]
        %v626 = vld [vmem:[%s570 + $0x4] sm:$0xf]
        %v627 = vld [vmem:[%s570 + $0x8] sm:$0xf]
        %v628 = vld [vmem:[%s570 + $0xc] sm:$0xf]
        %v629 = vld [vmem:[%s570 + $0x10] sm:$0xf]
        %v630 = vld [vmem:[%s570 + $0x14] sm:$0xf]
        %v631 = vld [vmem:[%s570 + $0x18] sm:$0xf]
        %v632 = vld [vmem:[%s570 + $0x1c] sm:$0xf]
        %v633 = vld [vmem:[%s570 + $0x20] sm:$0xf]
        %v634 = vld [vmem:[%s570 + $0x24] sm:$0xf]
        %v635 = vld [vmem:[%s570 + $0x28] sm:$0xf]
        %v636 = vld [vmem:[%s570 + $0x2c] sm:$0xf]
        %v637 = vld [vmem:[%s570 + $0x30] sm:$0xf]
        %v638 = vld [vmem:[%s570 + $0x34] sm:$0xf]
        %v639 = vld [vmem:[%s570 + $0x38] sm:$0xf]
        %v640 = vld [vmem:[%s570 + $0x3c] sm:$0xf]
        %v641 = vld [vmem:[%s503] sm:$0xff]
        %v642 = vld [vmem:[%s503 + $0x8] sm:$0xff]
        %v643 = vld [vmem:[%s503 + $0x10] sm:$0xff]
        %v644 = vld [vmem:[%s503 + $0x18] sm:$0xff]
        %v645 = vld [vmem:[%s503 + $0x20] sm:$0xff]
        %v646 = vld [vmem:[%s503 + $0x28] sm:$0xff]
        %v647 = vld [vmem:[%s503 + $0x30] sm:$0xff]
        %v648 = vld [vmem:[%s503 + $0x38] sm:$0xff]
        %v649 = vld [vmem:[%s503 + $0x40] sm:$0xff]
        %v650 = vld [vmem:[%s503 + $0x48] sm:$0xff]
        %v651 = vld [vmem:[%s503 + $0x50] sm:$0xff]
        %v652 = vld [vmem:[%s503 + $0x58] sm:$0xff]
        %v653 = vld [vmem:[%s503 + $0x60] sm:$0xff]
        %v654 = vld [vmem:[%s503 + $0x68] sm:$0xff]
        %v655 = vld [vmem:[%s503 + $0x70] sm:$0xff]
        %v656 = vld [vmem:[%s503 + $0x78] sm:$0xff]
        %v673 = vunpack.c.l.b16 %v625
        %v674 = vunpack.c.l.b16 %v626
        %v675 = vunpack.c.l.b16 %v627
        %v676 = vunpack.c.l.b16 %v628
        %v677 = vunpack.c.l.b16 %v629
        %v678 = vunpack.c.l.b16 %v630
        %v679 = vunpack.c.l.b16 %v631
        %v680 = vunpack.c.l.b16 %v632
        %v681 = vunpack.c.l.b16 %v633
        %v682 = vunpack.c.l.b16 %v634
        %v683 = vunpack.c.l.b16 %v635
        %v684 = vunpack.c.l.b16 %v636
        %v685 = vunpack.c.l.b16 %v637
        %v686 = vunpack.c.l.b16 %v638
        %v687 = vunpack.c.l.b16 %v639
        %v688 = vunpack.c.l.b16 %v640
        %v689 = vpack.c.b16 %v674, %v673
        %v690 = vpack.c.b16 %v676, %v675
        %v691 = vpack.c.b16 %v678, %v677
        %v692 = vpack.c.b16 %v680, %v679
        %v693 = vpack.c.b16 %v682, %v681
        %v694 = vpack.c.b16 %v684, %v683
        %v695 = vpack.c.b16 %v686, %v685
        %v696 = vpack.c.b16 %v688, %v687
        %v721 = vunpack.c.l.b16 %v641
        %v722 = vunpack.c.h.b16 %v641
        %v723 = vunpack.c.l.b16 %v642
        %v724 = vunpack.c.h.b16 %v642
        %v725 = vunpack.c.l.b16 %v643
        %v726 = vunpack.c.h.b16 %v643
        %v727 = vunpack.c.l.b16 %v644
        %v728 = vunpack.c.h.b16 %v644
        %v729 = vunpack.c.l.b16 %v645
        %v730 = vunpack.c.h.b16 %v645
        %v731 = vunpack.c.l.b16 %v646
        %v732 = vunpack.c.h.b16 %v646
        %v733 = vunpack.c.l.b16 %v647
        %v734 = vunpack.c.h.b16 %v647
        %v735 = vunpack.c.l.b16 %v648
        %v736 = vunpack.c.h.b16 %v648
        %v737 = vunpack.c.l.b16 %v649
        %v738 = vunpack.c.h.b16 %v649
        %v739 = vunpack.c.l.b16 %v650
        %v740 = vunpack.c.h.b16 %v650
        %v741 = vunpack.c.l.b16 %v651
        %v742 = vunpack.c.h.b16 %v651
        %v743 = vunpack.c.l.b16 %v652
        %v744 = vunpack.c.h.b16 %v652
        %v745 = vunpack.c.l.b16 %v653
        %v746 = vunpack.c.h.b16 %v653
        %v747 = vunpack.c.l.b16 %v654
        %v748 = vunpack.c.h.b16 %v654
        %v749 = vunpack.c.l.b16 %v655
        %v750 = vunpack.c.h.b16 %v655
        %v751 = vunpack.c.l.b16 %v656
        %v752 = vunpack.c.h.b16 %v656
        %v753 = vpack.c.b16 %v723, %v721
        %v754 = vpack.c.b16 %v724, %v722
        %v755 = vpack.c.b16 %v727, %v725
        %v756 = vpack.c.b16 %v728, %v726
        %v757 = vpack.c.b16 %v731, %v729
        %v758 = vpack.c.b16 %v732, %v730
        %v759 = vpack.c.b16 %v735, %v733
        %v760 = vpack.c.b16 %v736, %v734
        %v761 = vpack.c.b16 %v739, %v737
        %v762 = vpack.c.b16 %v740, %v738
        %v763 = vpack.c.b16 %v743, %v741
        %v764 = vpack.c.b16 %v744, %v742
        %v765 = vpack.c.b16 %v747, %v745
        %v766 = vpack.c.b16 %v748, %v746
        %v767 = vpack.c.b16 %v751, %v749
        %v768 = vpack.c.b16 %v752, %v750
        %785 = vmatpush.bf16.msra.mxu0 %v767
        %786 = vmatpush.bf16.msra.mxu0 %v765
        %787 = vmatpush.bf16.msra.mxu0 %v763
        %788 = vmatpush.bf16.msra.mxu0 %v761
        %789 = vmatpush.bf16.msra.mxu0 %v759
        %790 = vmatpush.bf16.msra.mxu0 %v757
        %791 = vmatpush.bf16.msra.mxu0 %v755
        %792 = vmatpush.bf16.msra.mxu0 %v753
        %793 = vmatmul.bf16.gmra.mxu0 %v689
        %v794 = vpop.f32.mrf.mxu0
        %v795 = vadd.f32 0.0, %v794
        %v796 = vpop.f32.mrf.mxu0
        %v797 = vadd.f32 0.0, %v796
        %798 = vmatmul.bf16.gmra.mxu0 %v690
        %v799 = vpop.f32.mrf.mxu0
        %v800 = vadd.f32 0.0, %v799
        %v801 = vpop.f32.mrf.mxu0
        %v802 = vadd.f32 0.0, %v801
        %803 = vmatmul.bf16.gmra.mxu0 %v691
        %v804 = vpop.f32.mrf.mxu0
        %v805 = vadd.f32 0.0, %v804
        %v806 = vpop.f32.mrf.mxu0
        %v807 = vadd.f32 0.0, %v806
        %808 = vmatmul.bf16.gmra.mxu0 %v692
        %v809 = vpop.f32.mrf.mxu0
        %v810 = vadd.f32 0.0, %v809
        %v811 = vpop.f32.mrf.mxu0
        %v812 = vadd.f32 0.0, %v811
        %813 = vmatmul.bf16.gmra.mxu0 %v693
        %v814 = vpop.f32.mrf.mxu0
        %v815 = vadd.f32 0.0, %v814
        %v816 = vpop.f32.mrf.mxu0
        %v817 = vadd.f32 0.0, %v816
        %818 = vmatmul.bf16.gmra.mxu0 %v694
        %v819 = vpop.f32.mrf.mxu0
        %v820 = vadd.f32 0.0, %v819
        %v821 = vpop.f32.mrf.mxu0
        %v822 = vadd.f32 0.0, %v821
        %823 = vmatmul.bf16.gmra.mxu0 %v695
        %v824 = vpop.f32.mrf.mxu0
        %v825 = vadd.f32 0.0, %v824
        %v826 = vpop.f32.mrf.mxu0
        %v827 = vadd.f32 0.0, %v826
        %828 = vmatmul.bf16.gmra.mxu0 %v696
        %v829 = vpop.f32.mrf.mxu0
        %v830 = vadd.f32 0.0, %v829
        %v831 = vpop.f32.mrf.mxu0
        %v832 = vadd.f32 0.0, %v831
        %833 = vdwg.mxu0
        %834 = vmatpush.bf16.msra.mxu0 %v768
        %835 = vmatpush.bf16.msra.mxu0 %v766
        %836 = vmatpush.bf16.msra.mxu0 %v764
        %837 = vmatpush.bf16.msra.mxu0 %v762
        %838 = vmatpush.bf16.msra.mxu0 %v760
        %839 = vmatpush.bf16.msra.mxu0 %v758
        %840 = vmatpush.bf16.msra.mxu0 %v756
        %841 = vmatpush.bf16.msra.mxu0 %v754
        %842 = vmatmul.bf16.gmra.mxu0 %v689
        %v843 = vpop.f32.mrf.mxu0
        %v844 = vadd.f32 0.0, %v843
        %v845 = vpop.f32.mrf.mxu0
        %v846 = vadd.f32 0.0, %v845
        %847 = vmatmul.bf16.gmra.mxu0 %v690
        %v848 = vpop.f32.mrf.mxu0
        %v849 = vadd.f32 0.0, %v848
        %v850 = vpop.f32.mrf.mxu0
        %v851 = vadd.f32 0.0, %v850
        %852 = vmatmul.bf16.gmra.mxu0 %v691
        %v853 = vpop.f32.mrf.mxu0
        %v854 = vadd.f32 0.0, %v853
        %v855 = vpop.f32.mrf.mxu0
        %v856 = vadd.f32 0.0, %v855
        %857 = vmatmul.bf16.gmra.mxu0 %v692
        %v858 = vpop.f32.mrf.mxu0
        %v859 = vadd.f32 0.0, %v858
        %v860 = vpop.f32.mrf.mxu0
        %v861 = vadd.f32 0.0, %v860
        %862 = vmatmul.bf16.gmra.mxu0 %v693
        %v863 = vpop.f32.mrf.mxu0
        %v864 = vadd.f32 0.0, %v863
        %v865 = vpop.f32.mrf.mxu0
        %v866 = vadd.f32 0.0, %v865
        %867 = vmatmul.bf16.gmra.mxu0 %v694
        %v868 = vpop.f32.mrf.mxu0
        %v869 = vadd.f32 0.0, %v868
        %v870 = vpop.f32.mrf.mxu0
        %v871 = vadd.f32 0.0, %v870
        %872 = vmatmul.bf16.gmra.mxu0 %v695
        %v873 = vpop.f32.mrf.mxu0
        %v874 = vadd.f32 0.0, %v873
        %v875 = vpop.f32.mrf.mxu0
        %v876 = vadd.f32 0.0, %v875
        %877 = vmatmul.bf16.gmra.mxu0 %v696
        %v878 = vpop.f32.mrf.mxu0
        %v879 = vadd.f32 0.0, %v878
        %v880 = vpop.f32.mrf.mxu0
        %v881 = vadd.f32 0.0, %v880
        %882 = vdwg.mxu0
        %v883 = vxor.u32 %v795, 2147483648
        %v884 = vxor.u32 %v797, 2147483648
        %v885 = vxor.u32 %v800, 2147483648
        %v886 = vxor.u32 %v802, 2147483648
        %v887 = vxor.u32 %v805, 2147483648
        %v888 = vxor.u32 %v807, 2147483648
        %v889 = vxor.u32 %v810, 2147483648
        %v890 = vxor.u32 %v812, 2147483648
        %v891 = vxor.u32 %v815, 2147483648
        %v892 = vxor.u32 %v817, 2147483648
        %v893 = vxor.u32 %v820, 2147483648
        %v894 = vxor.u32 %v822, 2147483648
        %v895 = vxor.u32 %v825, 2147483648
        %v896 = vxor.u32 %v827, 2147483648
        %v897 = vxor.u32 %v830, 2147483648
        %v898 = vxor.u32 %v832, 2147483648
        %v899 = vmul.f32 %v883, 1.442695
        %v900 = vpow.pop %v899
        %v901 = vmul.f32 %v884, 1.442695
        %v902 = vpow.pop %v901
        %v903 = vmul.f32 %v885, 1.442695
        %v904 = vpow.pop %v903
        %v905 = vmul.f32 %v886, 1.442695
        %v906 = vpow.pop %v905
        %v907 = vmul.f32 %v887, 1.442695
        %v908 = vpow.pop %v907
        %v909 = vmul.f32 %v888, 1.442695
        %v910 = vpow.pop %v909
        %v911 = vmul.f32 %v889, 1.442695
        %v912 = vpow.pop %v911
        %v913 = vmul.f32 %v890, 1.442695
        %v914 = vpow.pop %v913
        %v915 = vmul.f32 %v891, 1.442695
        %v916 = vpow.pop %v915
        %v917 = vmul.f32 %v892, 1.442695
        %v918 = vpow.pop %v917
        %v919 = vmul.f32 %v893, 1.442695
        %v920 = vpow.pop %v919
        %v921 = vmul.f32 %v894, 1.442695
        %v922 = vpow.pop %v921
        %v923 = vmul.f32 %v895, 1.442695
        %v924 = vpow.pop %v923
        %v925 = vmul.f32 %v896, 1.442695
        %v926 = vpow.pop %v925
        %v927 = vmul.f32 %v897, 1.442695
        %v928 = vpow.pop %v927
        %v929 = vmul.f32 %v898, 1.442695
        %v930 = vpow.pop %v929
        %v931 = vadd.f32 %v900, 1.0
        %v932 = vadd.f32 %v902, 1.0
        %v933 = vadd.f32 %v904, 1.0
        %v934 = vadd.f32 %v906, 1.0
        %v935 = vadd.f32 %v908, 1.0
        %v936 = vadd.f32 %v910, 1.0
        %v937 = vadd.f32 %v912, 1.0
        %v938 = vadd.f32 %v914, 1.0
        %v939 = vadd.f32 %v916, 1.0
        %v940 = vadd.f32 %v918, 1.0
        %v941 = vadd.f32 %v920, 1.0
        %v942 = vadd.f32 %v922, 1.0
        %v943 = vadd.f32 %v924, 1.0
        %v944 = vadd.f32 %v926, 1.0
        %v945 = vadd.f32 %v928, 1.0
        %v946 = vadd.f32 %v930, 1.0
        %v947 = vrcp.pop %v931
        %v948 = vmul.f32 %v931, %v947
        %v949 = vsub.f32 1.0, %v948
        %v950 = vmul.f32 %v947, %v949
        %v951 = vadd.f32 %v947, %v950
        %vm952 = vweird.f32 %v931
        %vm953 = vweird.f32 %v947
        %vm954 = vmor %vm952, %vm953
        %v955 = vsel %vm954, %v947, %v951
        %v956 = vand.u32 2147483647, %v931
        %vm957 = vcmp.eq.f32.partialorder %v956, 8.507059e+37
        %v958 = vand.u32 %v931, 2147483648
        %v959 = vor.u32 1.1754944e-38, %v958
        %v960 = vsel %vm957, %v959, %v955
        %v961 = vmul.f32 1.0, %v960
        %v962 = vrcp.pop %v932
        %v963 = vmul.f32 %v932, %v962
        %v964 = vsub.f32 1.0, %v963
        %v965 = vmul.f32 %v962, %v964
        %v966 = vadd.f32 %v962, %v965
        %vm967 = vweird.f32 %v932
        %vm968 = vweird.f32 %v962
        %vm969 = vmor %vm967, %vm968
        %v970 = vsel %vm969, %v962, %v966
        %v971 = vand.u32 2147483647, %v932
        %vm972 = vcmp.eq.f32.partialorder %v971, 8.507059e+37
        %v973 = vand.u32 %v932, 2147483648
        %v974 = vor.u32 1.1754944e-38, %v973
        %v975 = vsel %vm972, %v974, %v970
        %v976 = vmul.f32 1.0, %v975
        %v977 = vrcp.pop %v933
        %v978 = vmul.f32 %v933, %v977
        %v979 = vsub.f32 1.0, %v978
        %v980 = vmul.f32 %v977, %v979
        %v981 = vadd.f32 %v977, %v980
        %vm982 = vweird.f32 %v933
        %vm983 = vweird.f32 %v977
        %vm984 = vmor %vm982, %vm983
        %v985 = vsel %vm984, %v977, %v981
        %v986 = vand.u32 2147483647, %v933
        %vm987 = vcmp.eq.f32.partialorder %v986, 8.507059e+37
        %v988 = vand.u32 %v933, 2147483648
        %v989 = vor.u32 1.1754944e-38, %v988
        %v990 = vsel %vm987, %v989, %v985
        %v991 = vmul.f32 1.0, %v990
        %v992 = vrcp.pop %v934
        %v993 = vmul.f32 %v934, %v992
        %v994 = vsub.f32 1.0, %v993
        %v995 = vmul.f32 %v992, %v994
        %v996 = vadd.f32 %v992, %v995
        %vm997 = vweird.f32 %v934
        %vm998 = vweird.f32 %v992
        %vm999 = vmor %vm997, %vm998
        %v1000 = vsel %vm999, %v992, %v996
        %v1001 = vand.u32 2147483647, %v934
        %vm1002 = vcmp.eq.f32.partialorder %v1001, 8.507059e+37
        %v1003 = vand.u32 %v934, 2147483648
        %v1004 = vor.u32 1.1754944e-38, %v1003
        %v1005 = vsel %vm1002, %v1004, %v1000
        %v1006 = vmul.f32 1.0, %v1005
        %v1007 = vrcp.pop %v935
        %v1008 = vmul.f32 %v935, %v1007
        %v1009 = vsub.f32 1.0, %v1008
        %v1010 = vmul.f32 %v1007, %v1009
        %v1011 = vadd.f32 %v1007, %v1010
        %vm1012 = vweird.f32 %v935
        %vm1013 = vweird.f32 %v1007
        %vm1014 = vmor %vm1012, %vm1013
        %v1015 = vsel %vm1014, %v1007, %v1011
        %v1016 = vand.u32 2147483647, %v935
        %vm1017 = vcmp.eq.f32.partialorder %v1016, 8.507059e+37
        %v1018 = vand.u32 %v935, 2147483648
        %v1019 = vor.u32 1.1754944e-38, %v1018
        %v1020 = vsel %vm1017, %v1019, %v1015
        %v1021 = vmul.f32 1.0, %v1020
        %v1022 = vrcp.pop %v936
        %v1023 = vmul.f32 %v936, %v1022
        %v1024 = vsub.f32 1.0, %v1023
        %v1025 = vmul.f32 %v1022, %v1024
        %v1026 = vadd.f32 %v1022, %v1025
        %vm1027 = vweird.f32 %v936
        %vm1028 = vweird.f32 %v1022
        %vm1029 = vmor %vm1027, %vm1028
        %v1030 = vsel %vm1029, %v1022, %v1026
        %v1031 = vand.u32 2147483647, %v936
        %vm1032 = vcmp.eq.f32.partialorder %v1031, 8.507059e+37
        %v1033 = vand.u32 %v936, 2147483648
        %v1034 = vor.u32 1.1754944e-38, %v1033
        %v1035 = vsel %vm1032, %v1034, %v1030
        %v1036 = vmul.f32 1.0, %v1035
        %v1037 = vrcp.pop %v937
        %v1038 = vmul.f32 %v937, %v1037
        %v1039 = vsub.f32 1.0, %v1038
        %v1040 = vmul.f32 %v1037, %v1039
        %v1041 = vadd.f32 %v1037, %v1040
        %vm1042 = vweird.f32 %v937
        %vm1043 = vweird.f32 %v1037
        %vm1044 = vmor %vm1042, %vm1043
        %v1045 = vsel %vm1044, %v1037, %v1041
        %v1046 = vand.u32 2147483647, %v937
        %vm1047 = vcmp.eq.f32.partialorder %v1046, 8.507059e+37
        %v1048 = vand.u32 %v937, 2147483648
        %v1049 = vor.u32 1.1754944e-38, %v1048
        %v1050 = vsel %vm1047, %v1049, %v1045
        %v1051 = vmul.f32 1.0, %v1050
        %v1052 = vrcp.pop %v938
        %v1053 = vmul.f32 %v938, %v1052
        %v1054 = vsub.f32 1.0, %v1053
        %v1055 = vmul.f32 %v1052, %v1054
        %v1056 = vadd.f32 %v1052, %v1055
        %vm1057 = vweird.f32 %v938
        %vm1058 = vweird.f32 %v1052
        %vm1059 = vmor %vm1057, %vm1058
        %v1060 = vsel %vm1059, %v1052, %v1056
        %v1061 = vand.u32 2147483647, %v938
        %vm1062 = vcmp.eq.f32.partialorder %v1061, 8.507059e+37
        %v1063 = vand.u32 %v938, 2147483648
        %v1064 = vor.u32 1.1754944e-38, %v1063
        %v1065 = vsel %vm1062, %v1064, %v1060
        %v1066 = vmul.f32 1.0, %v1065
        %v1067 = vrcp.pop %v939
        %v1068 = vmul.f32 %v939, %v1067
        %v1069 = vsub.f32 1.0, %v1068
        %v1070 = vmul.f32 %v1067, %v1069
        %v1071 = vadd.f32 %v1067, %v1070
        %vm1072 = vweird.f32 %v939
        %vm1073 = vweird.f32 %v1067
        %vm1074 = vmor %vm1072, %vm1073
        %v1075 = vsel %vm1074, %v1067, %v1071
        %v1076 = vand.u32 2147483647, %v939
        %vm1077 = vcmp.eq.f32.partialorder %v1076, 8.507059e+37
        %v1078 = vand.u32 %v939, 2147483648
        %v1079 = vor.u32 1.1754944e-38, %v1078
        %v1080 = vsel %vm1077, %v1079, %v1075
        %v1081 = vmul.f32 1.0, %v1080
        %v1082 = vrcp.pop %v940
        %v1083 = vmul.f32 %v940, %v1082
        %v1084 = vsub.f32 1.0, %v1083
        %v1085 = vmul.f32 %v1082, %v1084
        %v1086 = vadd.f32 %v1082, %v1085
        %vm1087 = vweird.f32 %v940
        %vm1088 = vweird.f32 %v1082
        %vm1089 = vmor %vm1087, %vm1088
        %v1090 = vsel %vm1089, %v1082, %v1086
        %v1091 = vand.u32 2147483647, %v940
        %vm1092 = vcmp.eq.f32.partialorder %v1091, 8.507059e+37
        %v1093 = vand.u32 %v940, 2147483648
        %v1094 = vor.u32 1.1754944e-38, %v1093
        %v1095 = vsel %vm1092, %v1094, %v1090
        %v1096 = vmul.f32 1.0, %v1095
        %v1097 = vrcp.pop %v941
        %v1098 = vmul.f32 %v941, %v1097
        %v1099 = vsub.f32 1.0, %v1098
        %v1100 = vmul.f32 %v1097, %v1099
        %v1101 = vadd.f32 %v1097, %v1100
        %vm1102 = vweird.f32 %v941
        %vm1103 = vweird.f32 %v1097
        %vm1104 = vmor %vm1102, %vm1103
        %v1105 = vsel %vm1104, %v1097, %v1101
        %v1106 = vand.u32 2147483647, %v941
        %vm1107 = vcmp.eq.f32.partialorder %v1106, 8.507059e+37
        %v1108 = vand.u32 %v941, 2147483648
        %v1109 = vor.u32 1.1754944e-38, %v1108
        %v1110 = vsel %vm1107, %v1109, %v1105
        %v1111 = vmul.f32 1.0, %v1110
        %v1112 = vrcp.pop %v942
        %v1113 = vmul.f32 %v942, %v1112
        %v1114 = vsub.f32 1.0, %v1113
        %v1115 = vmul.f32 %v1112, %v1114
        %v1116 = vadd.f32 %v1112, %v1115
        %vm1117 = vweird.f32 %v942
        %vm1118 = vweird.f32 %v1112
        %vm1119 = vmor %vm1117, %vm1118
        %v1120 = vsel %vm1119, %v1112, %v1116
        %v1121 = vand.u32 2147483647, %v942
        %vm1122 = vcmp.eq.f32.partialorder %v1121, 8.507059e+37
        %v1123 = vand.u32 %v942, 2147483648
        %v1124 = vor.u32 1.1754944e-38, %v1123
        %v1125 = vsel %vm1122, %v1124, %v1120
        %v1126 = vmul.f32 1.0, %v1125
        %v1127 = vrcp.pop %v943
        %v1128 = vmul.f32 %v943, %v1127
        %v1129 = vsub.f32 1.0, %v1128
        %v1130 = vmul.f32 %v1127, %v1129
        %v1131 = vadd.f32 %v1127, %v1130
        %vm1132 = vweird.f32 %v943
        %vm1133 = vweird.f32 %v1127
        %vm1134 = vmor %vm1132, %vm1133
        %v1135 = vsel %vm1134, %v1127, %v1131
        %v1136 = vand.u32 2147483647, %v943
        %vm1137 = vcmp.eq.f32.partialorder %v1136, 8.507059e+37
        %v1138 = vand.u32 %v943, 2147483648
        %v1139 = vor.u32 1.1754944e-38, %v1138
        %v1140 = vsel %vm1137, %v1139, %v1135
        %v1141 = vmul.f32 1.0, %v1140
        %v1142 = vrcp.pop %v944
        %v1143 = vmul.f32 %v944, %v1142
        %v1144 = vsub.f32 1.0, %v1143
        %v1145 = vmul.f32 %v1142, %v1144
        %v1146 = vadd.f32 %v1142, %v1145
        %vm1147 = vweird.f32 %v944
        %vm1148 = vweird.f32 %v1142
        %vm1149 = vmor %vm1147, %vm1148
        %v1150 = vsel %vm1149, %v1142, %v1146
        %v1151 = vand.u32 2147483647, %v944
        %vm1152 = vcmp.eq.f32.partialorder %v1151, 8.507059e+37
        %v1153 = vand.u32 %v944, 2147483648
        %v1154 = vor.u32 1.1754944e-38, %v1153
        %v1155 = vsel %vm1152, %v1154, %v1150
        %v1156 = vmul.f32 1.0, %v1155
        %v1157 = vrcp.pop %v945
        %v1158 = vmul.f32 %v945, %v1157
        %v1159 = vsub.f32 1.0, %v1158
        %v1160 = vmul.f32 %v1157, %v1159
        %v1161 = vadd.f32 %v1157, %v1160
        %vm1162 = vweird.f32 %v945
        %vm1163 = vweird.f32 %v1157
        %vm1164 = vmor %vm1162, %vm1163
        %v1165 = vsel %vm1164, %v1157, %v1161
        %v1166 = vand.u32 2147483647, %v945
        %vm1167 = vcmp.eq.f32.partialorder %v1166, 8.507059e+37
        %v1168 = vand.u32 %v945, 2147483648
        %v1169 = vor.u32 1.1754944e-38, %v1168
        %v1170 = vsel %vm1167, %v1169, %v1165
        %v1171 = vmul.f32 1.0, %v1170
        %v1172 = vrcp.pop %v946
        %v1173 = vmul.f32 %v946, %v1172
        %v1174 = vsub.f32 1.0, %v1173
        %v1175 = vmul.f32 %v1172, %v1174
        %v1176 = vadd.f32 %v1172, %v1175
        %vm1177 = vweird.f32 %v946
        %vm1178 = vweird.f32 %v1172
        %vm1179 = vmor %vm1177, %vm1178
        %v1180 = vsel %vm1179, %v1172, %v1176
        %v1181 = vand.u32 2147483647, %v946
        %vm1182 = vcmp.eq.f32.partialorder %v1181, 8.507059e+37
        %v1183 = vand.u32 %v946, 2147483648
        %v1184 = vor.u32 1.1754944e-38, %v1183
        %v1185 = vsel %vm1182, %v1184, %v1180
        %v1186 = vmul.f32 1.0, %v1185
        %v1187 = vmul.f32 %v795, %v961
        %v1188 = vmul.f32 %v797, %v976
        %v1189 = vmul.f32 %v800, %v991
        %v1190 = vmul.f32 %v802, %v1006
        %v1191 = vmul.f32 %v805, %v1021
        %v1192 = vmul.f32 %v807, %v1036
        %v1193 = vmul.f32 %v810, %v1051
        %v1194 = vmul.f32 %v812, %v1066
        %v1195 = vmul.f32 %v815, %v1081
        %v1196 = vmul.f32 %v817, %v1096
        %v1197 = vmul.f32 %v820, %v1111
        %v1198 = vmul.f32 %v822, %v1126
        %v1199 = vmul.f32 %v825, %v1141
        %v1200 = vmul.f32 %v827, %v1156
        %v1201 = vmul.f32 %v830, %v1171
        %v1202 = vmul.f32 %v832, %v1186
        %v1203 = vmul.f32 %v1187, %v844
        %v1204 = vmul.f32 %v1188, %v846
        %v1205 = vmul.f32 %v1189, %v849
        %v1206 = vmul.f32 %v1190, %v851
        %v1207 = vmul.f32 %v1191, %v854
        %v1208 = vmul.f32 %v1192, %v856
        %v1209 = vmul.f32 %v1193, %v859
        %v1210 = vmul.f32 %v1194, %v861
        %v1211 = vmul.f32 %v1195, %v864
        %v1212 = vmul.f32 %v1196, %v866
        %v1213 = vmul.f32 %v1197, %v869
        %v1214 = vmul.f32 %v1198, %v871
        %v1215 = vmul.f32 %v1199, %v874
        %v1216 = vmul.f32 %v1200, %v876
        %v1217 = vmul.f32 %v1201, %v879
        %v1218 = vmul.f32 %v1202, %v881
        %v1219 = vpack.c.bf16 %v1204, %v1203
        %v1220 = vpack.c.bf16 %v1206, %v1205
        %v1221 = vpack.c.bf16 %v1208, %v1207
        %v1222 = vpack.c.bf16 %v1210, %v1209
        %v1223 = vpack.c.bf16 %v1212, %v1211
        %v1224 = vpack.c.bf16 %v1214, %v1213
        %v1225 = vpack.c.bf16 %v1216, %v1215
        %v1226 = vpack.c.bf16 %v1218, %v1217
        %v1227 = vld [vmem:[%s583] sm:$0xf]
        %v1228 = vld [vmem:[%s583 + $0x4] sm:$0xf]
        %v1229 = vld [vmem:[%s583 + $0x8] sm:$0xf]
        %v1230 = vld [vmem:[%s583 + $0xc] sm:$0xf]
        %v1231 = vld [vmem:[%s583 + $0x10] sm:$0xf]
        %v1232 = vld [vmem:[%s583 + $0x14] sm:$0xf]
        %v1233 = vld [vmem:[%s583 + $0x18] sm:$0xf]
        %v1234 = vld [vmem:[%s583 + $0x1c] sm:$0xf]
        %v1235 = vld [vmem:[%s583 + $0x20] sm:$0xf]
        %v1236 = vld [vmem:[%s583 + $0x24] sm:$0xf]
        %v1237 = vld [vmem:[%s583 + $0x28] sm:$0xf]
        %v1238 = vld [vmem:[%s583 + $0x2c] sm:$0xf]
        %v1239 = vld [vmem:[%s583 + $0x30] sm:$0xf]
        %v1240 = vld [vmem:[%s583 + $0x34] sm:$0xf]
        %v1241 = vld [vmem:[%s583 + $0x38] sm:$0xf]
        %v1242 = vld [vmem:[%s583 + $0x3c] sm:$0xf]
        %v1243 = vld [vmem:[%s576] sm:$0xff]
        %v1244 = vld [vmem:[%s576 + $0x8] sm:$0xff]
        %v1245 = vld [vmem:[%s576 + $0x10] sm:$0xff]
        %v1246 = vld [vmem:[%s576 + $0x18] sm:$0xff]
        %v1247 = vld [vmem:[%s576 + $0x20] sm:$0xff]
        %v1248 = vld [vmem:[%s576 + $0x28] sm:$0xff]
        %v1249 = vld [vmem:[%s576 + $0x30] sm:$0xff]
        %v1250 = vld [vmem:[%s576 + $0x38] sm:$0xff]
        %v1251 = vld [vmem:[%s576 + $0x40] sm:$0xff]
        %v1252 = vld [vmem:[%s576 + $0x48] sm:$0xff]
        %v1253 = vld [vmem:[%s576 + $0x50] sm:$0xff]
        %v1254 = vld [vmem:[%s576 + $0x58] sm:$0xff]
        %v1255 = vld [vmem:[%s576 + $0x60] sm:$0xff]
        %v1256 = vld [vmem:[%s576 + $0x68] sm:$0xff]
        %v1257 = vld [vmem:[%s576 + $0x70] sm:$0xff]
        %v1258 = vld [vmem:[%s576 + $0x78] sm:$0xff]
        %v1259 = vld [vmem:[%s510] sm:$0xff]
        %v1260 = vld [vmem:[%s510 + $0x8] sm:$0xff]
        %v1261 = vld [vmem:[%s510 + $0x10] sm:$0xff]
        %v1262 = vld [vmem:[%s510 + $0x18] sm:$0xff]
        %v1263 = vld [vmem:[%s510 + $0x20] sm:$0xff]
        %v1264 = vld [vmem:[%s510 + $0x28] sm:$0xff]
        %v1265 = vld [vmem:[%s510 + $0x30] sm:$0xff]
        %v1266 = vld [vmem:[%s510 + $0x38] sm:$0xff]
        %v1267 = vld [vmem:[%s510 + $0x40] sm:$0xff]
        %v1268 = vld [vmem:[%s510 + $0x48] sm:$0xff]
        %v1269 = vld [vmem:[%s510 + $0x50] sm:$0xff]
        %v1270 = vld [vmem:[%s510 + $0x58] sm:$0xff]
        %v1271 = vld [vmem:[%s510 + $0x60] sm:$0xff]
        %v1272 = vld [vmem:[%s510 + $0x68] sm:$0xff]
        %v1273 = vld [vmem:[%s510 + $0x70] sm:$0xff]
        %v1274 = vld [vmem:[%s510 + $0x78] sm:$0xff]
        %v1291 = vunpack.c.l.b16 %v1259
        %v1292 = vunpack.c.h.b16 %v1259
        %v1293 = vunpack.c.l.b16 %v1260
        %v1294 = vunpack.c.h.b16 %v1260
        %v1295 = vunpack.c.l.b16 %v1261
        %v1296 = vunpack.c.h.b16 %v1261
        %v1297 = vunpack.c.l.b16 %v1262
        %v1298 = vunpack.c.h.b16 %v1262
        %v1299 = vunpack.c.l.b16 %v1263
        %v1300 = vunpack.c.h.b16 %v1263
        %v1301 = vunpack.c.l.b16 %v1264
        %v1302 = vunpack.c.h.b16 %v1264
        %v1303 = vunpack.c.l.b16 %v1265
        %v1304 = vunpack.c.h.b16 %v1265
        %v1305 = vunpack.c.l.b16 %v1266
        %v1306 = vunpack.c.h.b16 %v1266
        %v1307 = vunpack.c.l.b16 %v1267
        %v1308 = vunpack.c.h.b16 %v1267
        %v1309 = vunpack.c.l.b16 %v1268
        %v1310 = vunpack.c.h.b16 %v1268
        %v1311 = vunpack.c.l.b16 %v1269
        %v1312 = vunpack.c.h.b16 %v1269
        %v1313 = vunpack.c.l.b16 %v1270
        %v1314 = vunpack.c.h.b16 %v1270
        %v1315 = vunpack.c.l.b16 %v1271
        %v1316 = vunpack.c.h.b16 %v1271
        %v1317 = vunpack.c.l.b16 %v1272
        %v1318 = vunpack.c.h.b16 %v1272
        %v1319 = vunpack.c.l.b16 %v1273
        %v1320 = vunpack.c.h.b16 %v1273
        %v1321 = vunpack.c.l.b16 %v1274
        %v1322 = vunpack.c.h.b16 %v1274
        %v1323 = vpack.c.b16 %v1293, %v1291
        %v1324 = vpack.c.b16 %v1294, %v1292
        %v1325 = vpack.c.b16 %v1297, %v1295
        %v1326 = vpack.c.b16 %v1298, %v1296
        %v1327 = vpack.c.b16 %v1301, %v1299
        %v1328 = vpack.c.b16 %v1302, %v1300
        %v1329 = vpack.c.b16 %v1305, %v1303
        %v1330 = vpack.c.b16 %v1306, %v1304
        %v1331 = vpack.c.b16 %v1309, %v1307
        %v1332 = vpack.c.b16 %v1310, %v1308
        %v1333 = vpack.c.b16 %v1313, %v1311
        %v1334 = vpack.c.b16 %v1314, %v1312
        %v1335 = vpack.c.b16 %v1317, %v1315
        %v1336 = vpack.c.b16 %v1318, %v1316
        %v1337 = vpack.c.b16 %v1321, %v1319
        %v1338 = vpack.c.b16 %v1322, %v1320
        %1355 = vmatpush.bf16.msra.mxu0 %v1337
        %1356 = vmatpush.bf16.msra.mxu0 %v1335
        %1357 = vmatpush.bf16.msra.mxu0 %v1333
        %1358 = vmatpush.bf16.msra.mxu0 %v1331
        %1359 = vmatpush.bf16.msra.mxu0 %v1329
        %1360 = vmatpush.bf16.msra.mxu0 %v1327
        %1361 = vmatpush.bf16.msra.mxu0 %v1325
        %1362 = vmatpush.bf16.msra.mxu0 %v1323
        %1363 = vmatmul.bf16.gmra.mxu0 %v689
        %v1364 = vpop.f32.mrf.mxu0
        %v1365 = vadd.f32 0.0, %v1364
        %v1366 = vpop.f32.mrf.mxu0
        %v1367 = vadd.f32 0.0, %v1366
        %1368 = vmatmul.bf16.gmra.mxu0 %v690
        %v1369 = vpop.f32.mrf.mxu0
        %v1370 = vadd.f32 0.0, %v1369
        %v1371 = vpop.f32.mrf.mxu0
        %v1372 = vadd.f32 0.0, %v1371
        %1373 = vmatmul.bf16.gmra.mxu0 %v691
        %v1374 = vpop.f32.mrf.mxu0
        %v1375 = vadd.f32 0.0, %v1374
        %v1376 = vpop.f32.mrf.mxu0
        %v1377 = vadd.f32 0.0, %v1376
        %1378 = vmatmul.bf16.gmra.mxu0 %v692
        %v1379 = vpop.f32.mrf.mxu0
        %v1380 = vadd.f32 0.0, %v1379
        %v1381 = vpop.f32.mrf.mxu0
        %v1382 = vadd.f32 0.0, %v1381
        %1383 = vmatmul.bf16.gmra.mxu0 %v693
        %v1384 = vpop.f32.mrf.mxu0
        %v1385 = vadd.f32 0.0, %v1384
        %v1386 = vpop.f32.mrf.mxu0
        %v1387 = vadd.f32 0.0, %v1386
        %1388 = vmatmul.bf16.gmra.mxu0 %v694
        %v1389 = vpop.f32.mrf.mxu0
        %v1390 = vadd.f32 0.0, %v1389
        %v1391 = vpop.f32.mrf.mxu0
        %v1392 = vadd.f32 0.0, %v1391
        %1393 = vmatmul.bf16.gmra.mxu0 %v695
        %v1394 = vpop.f32.mrf.mxu0
        %v1395 = vadd.f32 0.0, %v1394
        %v1396 = vpop.f32.mrf.mxu0
        %v1397 = vadd.f32 0.0, %v1396
        %1398 = vmatmul.bf16.gmra.mxu0 %v696
        %v1399 = vpop.f32.mrf.mxu0
        %v1400 = vadd.f32 0.0, %v1399
        %v1401 = vpop.f32.mrf.mxu0
        %v1402 = vadd.f32 0.0, %v1401
        %1403 = vdwg.mxu0
        %1404 = vmatpush.bf16.msra.mxu0 %v1338
        %1405 = vmatpush.bf16.msra.mxu0 %v1336
        %1406 = vmatpush.bf16.msra.mxu0 %v1334
        %1407 = vmatpush.bf16.msra.mxu0 %v1332
        %1408 = vmatpush.bf16.msra.mxu0 %v1330
        %1409 = vmatpush.bf16.msra.mxu0 %v1328
        %1410 = vmatpush.bf16.msra.mxu0 %v1326
        %1411 = vmatpush.bf16.msra.mxu0 %v1324
        %1412 = vmatmul.bf16.gmra.mxu0 %v689
        %v1413 = vpop.f32.mrf.mxu0
        %v1414 = vadd.f32 0.0, %v1413
        %v1415 = vpop.f32.mrf.mxu0
        %v1416 = vadd.f32 0.0, %v1415
        %1417 = vmatmul.bf16.gmra.mxu0 %v690
        %v1418 = vpop.f32.mrf.mxu0
        %v1419 = vadd.f32 0.0, %v1418
        %v1420 = vpop.f32.mrf.mxu0
        %v1421 = vadd.f32 0.0, %v1420
        %1422 = vmatmul.bf16.gmra.mxu0 %v691
        %v1423 = vpop.f32.mrf.mxu0
        %v1424 = vadd.f32 0.0, %v1423
        %v1425 = vpop.f32.mrf.mxu0
        %v1426 = vadd.f32 0.0, %v1425
        %1427 = vmatmul.bf16.gmra.mxu0 %v692
        %v1428 = vpop.f32.mrf.mxu0
        %v1429 = vadd.f32 0.0, %v1428
        %v1430 = vpop.f32.mrf.mxu0
        %v1431 = vadd.f32 0.0, %v1430
        %1432 = vmatmul.bf16.gmra.mxu0 %v693
        %v1433 = vpop.f32.mrf.mxu0
        %v1434 = vadd.f32 0.0, %v1433
        %v1435 = vpop.f32.mrf.mxu0
        %v1436 = vadd.f32 0.0, %v1435
        %1437 = vmatmul.bf16.gmra.mxu0 %v694
        %v1438 = vpop.f32.mrf.mxu0
        %v1439 = vadd.f32 0.0, %v1438
        %v1440 = vpop.f32.mrf.mxu0
        %v1441 = vadd.f32 0.0, %v1440
        %1442 = vmatmul.bf16.gmra.mxu0 %v695
        %v1443 = vpop.f32.mrf.mxu0
        %v1444 = vadd.f32 0.0, %v1443
        %v1445 = vpop.f32.mrf.mxu0
        %v1446 = vadd.f32 0.0, %v1445
        %1447 = vmatmul.bf16.gmra.mxu0 %v696
        %v1448 = vpop.f32.mrf.mxu0
        %v1449 = vadd.f32 0.0, %v1448
        %v1450 = vpop.f32.mrf.mxu0
        %v1451 = vadd.f32 0.0, %v1450
        %1452 = vdwg.mxu0
        %1454 = vset.pattern.permute.xlu0 0
        %1455 = vperm.xlu0 %1454, %v1243
        %v1456 = vpop.permute.xlu0 %1455
        %1459 = vset.pattern.permute.xlu0 0
        %1460 = vperm.xlu0 %1459, %v1244
        %v1461 = vpop.permute.xlu0 %1460
        %1464 = vset.pattern.permute.xlu0 0
        %1465 = vperm.xlu0 %1464, %v1245
        %v1466 = vpop.permute.xlu0 %1465
        %1469 = vset.pattern.permute.xlu0 0
        %1470 = vperm.xlu0 %1469, %v1246
        %v1471 = vpop.permute.xlu0 %1470
        %1474 = vset.pattern.permute.xlu0 0
        %1475 = vperm.xlu0 %1474, %v1247
        %v1476 = vpop.permute.xlu0 %1475
        %1479 = vset.pattern.permute.xlu0 0
        %1480 = vperm.xlu0 %1479, %v1248
        %v1481 = vpop.permute.xlu0 %1480
        %1484 = vset.pattern.permute.xlu0 0
        %1485 = vperm.xlu0 %1484, %v1249
        %v1486 = vpop.permute.xlu0 %1485
        %1489 = vset.pattern.permute.xlu0 0
        %1490 = vperm.xlu0 %1489, %v1250
        %v1491 = vpop.permute.xlu0 %1490
        %1494 = vset.pattern.permute.xlu0 0
        %1495 = vperm.xlu0 %1494, %v1251
        %v1496 = vpop.permute.xlu0 %1495
        %1499 = vset.pattern.permute.xlu0 0
        %1500 = vperm.xlu0 %1499, %v1252
        %v1501 = vpop.permute.xlu0 %1500
        %1504 = vset.pattern.permute.xlu0 0
        %1505 = vperm.xlu0 %1504, %v1253
        %v1506 = vpop.permute.xlu0 %1505
        %1509 = vset.pattern.permute.xlu0 0
        %1510 = vperm.xlu0 %1509, %v1254
        %v1511 = vpop.permute.xlu0 %1510
        %1514 = vset.pattern.permute.xlu0 0
        %1515 = vperm.xlu0 %1514, %v1255
        %v1516 = vpop.permute.xlu0 %1515
        %1519 = vset.pattern.permute.xlu0 0
        %1520 = vperm.xlu0 %1519, %v1256
        %v1521 = vpop.permute.xlu0 %1520
        %1524 = vset.pattern.permute.xlu0 0
        %1525 = vperm.xlu0 %1524, %v1257
        %v1526 = vpop.permute.xlu0 %1525
        %1529 = vset.pattern.permute.xlu0 0
        %1530 = vperm.xlu0 %1529, %v1258
        %v1531 = vpop.permute.xlu0 %1530
        %v1533 = vmul.f32 %v1365, %v1456
        %v1534 = vmul.f32 %v1367, %v1461
        %v1535 = vmul.f32 %v1370, %v1466
        %v1536 = vmul.f32 %v1372, %v1471
        %v1537 = vmul.f32 %v1375, %v1476
        %v1538 = vmul.f32 %v1377, %v1481
        %v1539 = vmul.f32 %v1380, %v1486
        %v1540 = vmul.f32 %v1382, %v1491
        %v1541 = vmul.f32 %v1385, %v1496
        %v1542 = vmul.f32 %v1387, %v1501
        %v1543 = vmul.f32 %v1390, %v1506
        %v1544 = vmul.f32 %v1392, %v1511
        %v1545 = vmul.f32 %v1395, %v1516
        %v1546 = vmul.f32 %v1397, %v1521
        %v1547 = vmul.f32 %v1400, %v1526
        %v1548 = vmul.f32 %v1402, %v1531
        %v1549 = vmul.f32 %v1414, %v1456
        %v1550 = vmul.f32 %v1416, %v1461
        %v1551 = vmul.f32 %v1419, %v1466
        %v1552 = vmul.f32 %v1421, %v1471
        %v1553 = vmul.f32 %v1424, %v1476
        %v1554 = vmul.f32 %v1426, %v1481
        %v1555 = vmul.f32 %v1429, %v1486
        %v1556 = vmul.f32 %v1431, %v1491
        %v1557 = vmul.f32 %v1434, %v1496
        %v1558 = vmul.f32 %v1436, %v1501
        %v1559 = vmul.f32 %v1439, %v1506
        %v1560 = vmul.f32 %v1441, %v1511
        %v1561 = vmul.f32 %v1444, %v1516
        %v1562 = vmul.f32 %v1446, %v1521
        %v1563 = vmul.f32 %v1449, %v1526
        %v1564 = vmul.f32 %v1451, %v1531
        %v1565 = vxor.u32 %v1533, 2147483648
        %v1566 = vxor.u32 %v1534, 2147483648
        %v1567 = vxor.u32 %v1535, 2147483648
        %v1568 = vxor.u32 %v1536, 2147483648
        %v1569 = vxor.u32 %v1537, 2147483648
        %v1570 = vxor.u32 %v1538, 2147483648
        %v1571 = vxor.u32 %v1539, 2147483648
        %v1572 = vxor.u32 %v1540, 2147483648
        %v1573 = vxor.u32 %v1541, 2147483648
        %v1574 = vxor.u32 %v1542, 2147483648
        %v1575 = vxor.u32 %v1543, 2147483648
        %v1576 = vxor.u32 %v1544, 2147483648
        %v1577 = vxor.u32 %v1545, 2147483648
        %v1578 = vxor.u32 %v1546, 2147483648
        %v1579 = vxor.u32 %v1547, 2147483648
        %v1580 = vxor.u32 %v1548, 2147483648
        %v1581 = vmul.f32 %v1565, 1.442695
        %v1582 = vpow.pop %v1581
        %v1583 = vmul.f32 %v1566, 1.442695
        %v1584 = vpow.pop %v1583
        %v1585 = vmul.f32 %v1567, 1.442695
        %v1586 = vpow.pop %v1585
        %v1587 = vmul.f32 %v1568, 1.442695
        %v1588 = vpow.pop %v1587
        %v1589 = vmul.f32 %v1569, 1.442695
        %v1590 = vpow.pop %v1589
        %v1591 = vmul.f32 %v1570, 1.442695
        %v1592 = vpow.pop %v1591
        %v1593 = vmul.f32 %v1571, 1.442695
        %v1594 = vpow.pop %v1593
        %v1595 = vmul.f32 %v1572, 1.442695
        %v1596 = vpow.pop %v1595
        %v1597 = vmul.f32 %v1573, 1.442695
        %v1598 = vpow.pop %v1597
        %v1599 = vmul.f32 %v1574, 1.442695
        %v1600 = vpow.pop %v1599
        %v1601 = vmul.f32 %v1575, 1.442695
        %v1602 = vpow.pop %v1601
        %v1603 = vmul.f32 %v1576, 1.442695
        %v1604 = vpow.pop %v1603
        %v1605 = vmul.f32 %v1577, 1.442695
        %v1606 = vpow.pop %v1605
        %v1607 = vmul.f32 %v1578, 1.442695
        %v1608 = vpow.pop %v1607
        %v1609 = vmul.f32 %v1579, 1.442695
        %v1610 = vpow.pop %v1609
        %v1611 = vmul.f32 %v1580, 1.442695
        %v1612 = vpow.pop %v1611
        %v1613 = vadd.f32 %v1582, 1.0
        %v1614 = vadd.f32 %v1584, 1.0
        %v1615 = vadd.f32 %v1586, 1.0
        %v1616 = vadd.f32 %v1588, 1.0
        %v1617 = vadd.f32 %v1590, 1.0
        %v1618 = vadd.f32 %v1592, 1.0
        %v1619 = vadd.f32 %v1594, 1.0
        %v1620 = vadd.f32 %v1596, 1.0
        %v1621 = vadd.f32 %v1598, 1.0
        %v1622 = vadd.f32 %v1600, 1.0
        %v1623 = vadd.f32 %v1602, 1.0
        %v1624 = vadd.f32 %v1604, 1.0
        %v1625 = vadd.f32 %v1606, 1.0
        %v1626 = vadd.f32 %v1608, 1.0
        %v1627 = vadd.f32 %v1610, 1.0
        %v1628 = vadd.f32 %v1612, 1.0
        %v1629 = vrcp.pop %v1613
        %v1630 = vmul.f32 %v1613, %v1629
        %v1631 = vsub.f32 1.0, %v1630
        %v1632 = vmul.f32 %v1629, %v1631
        %v1633 = vadd.f32 %v1629, %v1632
        %vm1634 = vweird.f32 %v1613
        %vm1635 = vweird.f32 %v1629
        %vm1636 = vmor %vm1634, %vm1635
        %v1637 = vsel %vm1636, %v1629, %v1633
        %v1638 = vand.u32 2147483647, %v1613
        %vm1639 = vcmp.eq.f32.partialorder %v1638, 8.507059e+37
        %v1640 = vand.u32 %v1613, 2147483648
        %v1641 = vor.u32 1.1754944e-38, %v1640
        %v1642 = vsel %vm1639, %v1641, %v1637
        %v1643 = vmul.f32 1.0, %v1642
        %v1644 = vrcp.pop %v1614
        %v1645 = vmul.f32 %v1614, %v1644
        %v1646 = vsub.f32 1.0, %v1645
        %v1647 = vmul.f32 %v1644, %v1646
        %v1648 = vadd.f32 %v1644, %v1647
        %vm1649 = vweird.f32 %v1614
        %vm1650 = vweird.f32 %v1644
        %vm1651 = vmor %vm1649, %vm1650
        %v1652 = vsel %vm1651, %v1644, %v1648
        %v1653 = vand.u32 2147483647, %v1614
        %vm1654 = vcmp.eq.f32.partialorder %v1653, 8.507059e+37
        %v1655 = vand.u32 %v1614, 2147483648
        %v1656 = vor.u32 1.1754944e-38, %v1655
        %v1657 = vsel %vm1654, %v1656, %v1652
        %v1658 = vmul.f32 1.0, %v1657
        %v1659 = vrcp.pop %v1615
        %v1660 = vmul.f32 %v1615, %v1659
        %v1661 = vsub.f32 1.0, %v1660
        %v1662 = vmul.f32 %v1659, %v1661
        %v1663 = vadd.f32 %v1659, %v1662
        %vm1664 = vweird.f32 %v1615
        %vm1665 = vweird.f32 %v1659
        %vm1666 = vmor %vm1664, %vm1665
        %v1667 = vsel %vm1666, %v1659, %v1663
        %v1668 = vand.u32 2147483647, %v1615
        %vm1669 = vcmp.eq.f32.partialorder %v1668, 8.507059e+37
        %v1670 = vand.u32 %v1615, 2147483648
        %v1671 = vor.u32 1.1754944e-38, %v1670
        %v1672 = vsel %vm1669, %v1671, %v1667
        %v1673 = vmul.f32 1.0, %v1672
        %v1674 = vrcp.pop %v1616
        %v1675 = vmul.f32 %v1616, %v1674
        %v1676 = vsub.f32 1.0, %v1675
        %v1677 = vmul.f32 %v1674, %v1676
        %v1678 = vadd.f32 %v1674, %v1677
        %vm1679 = vweird.f32 %v1616
        %vm1680 = vweird.f32 %v1674
        %vm1681 = vmor %vm1679, %vm1680
        %v1682 = vsel %vm1681, %v1674, %v1678
        %v1683 = vand.u32 2147483647, %v1616
        %vm1684 = vcmp.eq.f32.partialorder %v1683, 8.507059e+37
        %v1685 = vand.u32 %v1616, 2147483648
        %v1686 = vor.u32 1.1754944e-38, %v1685
        %v1687 = vsel %vm1684, %v1686, %v1682
        %v1688 = vmul.f32 1.0, %v1687
        %v1689 = vrcp.pop %v1617
        %v1690 = vmul.f32 %v1617, %v1689
        %v1691 = vsub.f32 1.0, %v1690
        %v1692 = vmul.f32 %v1689, %v1691
        %v1693 = vadd.f32 %v1689, %v1692
        %vm1694 = vweird.f32 %v1617
        %vm1695 = vweird.f32 %v1689
        %vm1696 = vmor %vm1694, %vm1695
        %v1697 = vsel %vm1696, %v1689, %v1693
        %v1698 = vand.u32 2147483647, %v1617
        %vm1699 = vcmp.eq.f32.partialorder %v1698, 8.507059e+37
        %v1700 = vand.u32 %v1617, 2147483648
        %v1701 = vor.u32 1.1754944e-38, %v1700
        %v1702 = vsel %vm1699, %v1701, %v1697
        %v1703 = vmul.f32 1.0, %v1702
        %v1704 = vrcp.pop %v1618
        %v1705 = vmul.f32 %v1618, %v1704
        %v1706 = vsub.f32 1.0, %v1705
        %v1707 = vmul.f32 %v1704, %v1706
        %v1708 = vadd.f32 %v1704, %v1707
        %vm1709 = vweird.f32 %v1618
        %vm1710 = vweird.f32 %v1704
        %vm1711 = vmor %vm1709, %vm1710
        %v1712 = vsel %vm1711, %v1704, %v1708
        %v1713 = vand.u32 2147483647, %v1618
        %vm1714 = vcmp.eq.f32.partialorder %v1713, 8.507059e+37
        %v1715 = vand.u32 %v1618, 2147483648
        %v1716 = vor.u32 1.1754944e-38, %v1715
        %v1717 = vsel %vm1714, %v1716, %v1712
        %v1718 = vmul.f32 1.0, %v1717
        %v1719 = vrcp.pop %v1619
        %v1720 = vmul.f32 %v1619, %v1719
        %v1721 = vsub.f32 1.0, %v1720
        %v1722 = vmul.f32 %v1719, %v1721
        %v1723 = vadd.f32 %v1719, %v1722
        %vm1724 = vweird.f32 %v1619
        %vm1725 = vweird.f32 %v1719
        %vm1726 = vmor %vm1724, %vm1725
        %v1727 = vsel %vm1726, %v1719, %v1723
        %v1728 = vand.u32 2147483647, %v1619
        %vm1729 = vcmp.eq.f32.partialorder %v1728, 8.507059e+37
        %v1730 = vand.u32 %v1619, 2147483648
        %v1731 = vor.u32 1.1754944e-38, %v1730
        %v1732 = vsel %vm1729, %v1731, %v1727
        %v1733 = vmul.f32 1.0, %v1732
        %v1734 = vrcp.pop %v1620
        %v1735 = vmul.f32 %v1620, %v1734
        %v1736 = vsub.f32 1.0, %v1735
        %v1737 = vmul.f32 %v1734, %v1736
        %v1738 = vadd.f32 %v1734, %v1737
        %vm1739 = vweird.f32 %v1620
        %vm1740 = vweird.f32 %v1734
        %vm1741 = vmor %vm1739, %vm1740
        %v1742 = vsel %vm1741, %v1734, %v1738
        %v1743 = vand.u32 2147483647, %v1620
        %vm1744 = vcmp.eq.f32.partialorder %v1743, 8.507059e+37
        %v1745 = vand.u32 %v1620, 2147483648
        %v1746 = vor.u32 1.1754944e-38, %v1745
        %v1747 = vsel %vm1744, %v1746, %v1742
        %v1748 = vmul.f32 1.0, %v1747
        %v1749 = vrcp.pop %v1621
        %v1750 = vmul.f32 %v1621, %v1749
        %v1751 = vsub.f32 1.0, %v1750
        %v1752 = vmul.f32 %v1749, %v1751
        %v1753 = vadd.f32 %v1749, %v1752
        %vm1754 = vweird.f32 %v1621
        %vm1755 = vweird.f32 %v1749
        %vm1756 = vmor %vm1754, %vm1755
        %v1757 = vsel %vm1756, %v1749, %v1753
        %v1758 = vand.u32 2147483647, %v1621
        %vm1759 = vcmp.eq.f32.partialorder %v1758, 8.507059e+37
        %v1760 = vand.u32 %v1621, 2147483648
        %v1761 = vor.u32 1.1754944e-38, %v1760
        %v1762 = vsel %vm1759, %v1761, %v1757
        %v1763 = vmul.f32 1.0, %v1762
        %v1764 = vrcp.pop %v1622
        %v1765 = vmul.f32 %v1622, %v1764
        %v1766 = vsub.f32 1.0, %v1765
        %v1767 = vmul.f32 %v1764, %v1766
        %v1768 = vadd.f32 %v1764, %v1767
        %vm1769 = vweird.f32 %v1622
        %vm1770 = vweird.f32 %v1764
        %vm1771 = vmor %vm1769, %vm1770
        %v1772 = vsel %vm1771, %v1764, %v1768
        %v1773 = vand.u32 2147483647, %v1622
        %vm1774 = vcmp.eq.f32.partialorder %v1773, 8.507059e+37
        %v1775 = vand.u32 %v1622, 2147483648
        %v1776 = vor.u32 1.1754944e-38, %v1775
        %v1777 = vsel %vm1774, %v1776, %v1772
        %v1778 = vmul.f32 1.0, %v1777
        %v1779 = vrcp.pop %v1623
        %v1780 = vmul.f32 %v1623, %v1779
        %v1781 = vsub.f32 1.0, %v1780
        %v1782 = vmul.f32 %v1779, %v1781
        %v1783 = vadd.f32 %v1779, %v1782
        %vm1784 = vweird.f32 %v1623
        %vm1785 = vweird.f32 %v1779
        %vm1786 = vmor %vm1784, %vm1785
        %v1787 = vsel %vm1786, %v1779, %v1783
        %v1788 = vand.u32 2147483647, %v1623
        %vm1789 = vcmp.eq.f32.partialorder %v1788, 8.507059e+37
        %v1790 = vand.u32 %v1623, 2147483648
        %v1791 = vor.u32 1.1754944e-38, %v1790
        %v1792 = vsel %vm1789, %v1791, %v1787
        %v1793 = vmul.f32 1.0, %v1792
        %v1794 = vrcp.pop %v1624
        %v1795 = vmul.f32 %v1624, %v1794
        %v1796 = vsub.f32 1.0, %v1795
        %v1797 = vmul.f32 %v1794, %v1796
        %v1798 = vadd.f32 %v1794, %v1797
        %vm1799 = vweird.f32 %v1624
        %vm1800 = vweird.f32 %v1794
        %vm1801 = vmor %vm1799, %vm1800
        %v1802 = vsel %vm1801, %v1794, %v1798
        %v1803 = vand.u32 2147483647, %v1624
        %vm1804 = vcmp.eq.f32.partialorder %v1803, 8.507059e+37
        %v1805 = vand.u32 %v1624, 2147483648
        %v1806 = vor.u32 1.1754944e-38, %v1805
        %v1807 = vsel %vm1804, %v1806, %v1802
        %v1808 = vmul.f32 1.0, %v1807
        %v1809 = vrcp.pop %v1625
        %v1810 = vmul.f32 %v1625, %v1809
        %v1811 = vsub.f32 1.0, %v1810
        %v1812 = vmul.f32 %v1809, %v1811
        %v1813 = vadd.f32 %v1809, %v1812
        %vm1814 = vweird.f32 %v1625
        %vm1815 = vweird.f32 %v1809
        %vm1816 = vmor %vm1814, %vm1815
        %v1817 = vsel %vm1816, %v1809, %v1813
        %v1818 = vand.u32 2147483647, %v1625
        %vm1819 = vcmp.eq.f32.partialorder %v1818, 8.507059e+37
        %v1820 = vand.u32 %v1625, 2147483648
        %v1821 = vor.u32 1.1754944e-38, %v1820
        %v1822 = vsel %vm1819, %v1821, %v1817
        %v1823 = vmul.f32 1.0, %v1822
        %v1824 = vrcp.pop %v1626
        %v1825 = vmul.f32 %v1626, %v1824
        %v1826 = vsub.f32 1.0, %v1825
        %v1827 = vmul.f32 %v1824, %v1826
        %v1828 = vadd.f32 %v1824, %v1827
        %vm1829 = vweird.f32 %v1626
        %vm1830 = vweird.f32 %v1824
        %vm1831 = vmor %vm1829, %vm1830
        %v1832 = vsel %vm1831, %v1824, %v1828
        %v1833 = vand.u32 2147483647, %v1626
        %vm1834 = vcmp.eq.f32.partialorder %v1833, 8.507059e+37
        %v1835 = vand.u32 %v1626, 2147483648
        %v1836 = vor.u32 1.1754944e-38, %v1835
        %v1837 = vsel %vm1834, %v1836, %v1832
        %v1838 = vmul.f32 1.0, %v1837
        %v1839 = vrcp.pop %v1627
        %v1840 = vmul.f32 %v1627, %v1839
        %v1841 = vsub.f32 1.0, %v1840
        %v1842 = vmul.f32 %v1839, %v1841
        %v1843 = vadd.f32 %v1839, %v1842
        %vm1844 = vweird.f32 %v1627
        %vm1845 = vweird.f32 %v1839
        %vm1846 = vmor %vm1844, %vm1845
        %v1847 = vsel %vm1846, %v1839, %v1843
        %v1848 = vand.u32 2147483647, %v1627
        %vm1849 = vcmp.eq.f32.partialorder %v1848, 8.507059e+37
        %v1850 = vand.u32 %v1627, 2147483648
        %v1851 = vor.u32 1.1754944e-38, %v1850
        %v1852 = vsel %vm1849, %v1851, %v1847
        %v1853 = vmul.f32 1.0, %v1852
        %v1854 = vrcp.pop %v1628
        %v1855 = vmul.f32 %v1628, %v1854
        %v1856 = vsub.f32 1.0, %v1855
        %v1857 = vmul.f32 %v1854, %v1856
        %v1858 = vadd.f32 %v1854, %v1857
        %vm1859 = vweird.f32 %v1628
        %vm1860 = vweird.f32 %v1854
        %vm1861 = vmor %vm1859, %vm1860
        %v1862 = vsel %vm1861, %v1854, %v1858
        %v1863 = vand.u32 2147483647, %v1628
        %vm1864 = vcmp.eq.f32.partialorder %v1863, 8.507059e+37
        %v1865 = vand.u32 %v1628, 2147483648
        %v1866 = vor.u32 1.1754944e-38, %v1865
        %v1867 = vsel %vm1864, %v1866, %v1862
        %v1868 = vmul.f32 1.0, %v1867
        %v1869 = vmul.f32 %v1533, %v1643
        %v1870 = vmul.f32 %v1534, %v1658
        %v1871 = vmul.f32 %v1535, %v1673
        %v1872 = vmul.f32 %v1536, %v1688
        %v1873 = vmul.f32 %v1537, %v1703
        %v1874 = vmul.f32 %v1538, %v1718
        %v1875 = vmul.f32 %v1539, %v1733
        %v1876 = vmul.f32 %v1540, %v1748
        %v1877 = vmul.f32 %v1541, %v1763
        %v1878 = vmul.f32 %v1542, %v1778
        %v1879 = vmul.f32 %v1543, %v1793
        %v1880 = vmul.f32 %v1544, %v1808
        %v1881 = vmul.f32 %v1545, %v1823
        %v1882 = vmul.f32 %v1546, %v1838
        %v1883 = vmul.f32 %v1547, %v1853
        %v1884 = vmul.f32 %v1548, %v1868
        %v1885 = vmul.f32 %v1869, %v1549
        %v1886 = vmul.f32 %v1870, %v1550
        %v1887 = vmul.f32 %v1871, %v1551
        %v1888 = vmul.f32 %v1872, %v1552
        %v1889 = vmul.f32 %v1873, %v1553
        %v1890 = vmul.f32 %v1874, %v1554
        %v1891 = vmul.f32 %v1875, %v1555
        %v1892 = vmul.f32 %v1876, %v1556
        %v1893 = vmul.f32 %v1877, %v1557
        %v1894 = vmul.f32 %v1878, %v1558
        %v1895 = vmul.f32 %v1879, %v1559
        %v1896 = vmul.f32 %v1880, %v1560
        %v1897 = vmul.f32 %v1881, %v1561
        %v1898 = vmul.f32 %v1882, %v1562
        %v1899 = vmul.f32 %v1883, %v1563
        %v1900 = vmul.f32 %v1884, %v1564
        %v1901 = vpack.c.bf16 %v1886, %v1885
        %v1902 = vpack.c.bf16 %v1888, %v1887
        %v1903 = vpack.c.bf16 %v1890, %v1889
        %v1904 = vpack.c.bf16 %v1892, %v1891
        %v1905 = vpack.c.bf16 %v1894, %v1893
        %v1906 = vpack.c.bf16 %v1896, %v1895
        %v1907 = vpack.c.bf16 %v1898, %v1897
        %v1908 = vpack.c.bf16 %v1900, %v1899
        %v1909 = vld [vmem:[%s596] sm:$0xf]
        %v1910 = vld [vmem:[%s596 + $0x4] sm:$0xf]
        %v1911 = vld [vmem:[%s596 + $0x8] sm:$0xf]
        %v1912 = vld [vmem:[%s596 + $0xc] sm:$0xf]
        %v1913 = vld [vmem:[%s596 + $0x10] sm:$0xf]
        %v1914 = vld [vmem:[%s596 + $0x14] sm:$0xf]
        %v1915 = vld [vmem:[%s596 + $0x18] sm:$0xf]
        %v1916 = vld [vmem:[%s596 + $0x1c] sm:$0xf]
        %v1917 = vld [vmem:[%s596 + $0x20] sm:$0xf]
        %v1918 = vld [vmem:[%s596 + $0x24] sm:$0xf]
        %v1919 = vld [vmem:[%s596 + $0x28] sm:$0xf]
        %v1920 = vld [vmem:[%s596 + $0x2c] sm:$0xf]
        %v1921 = vld [vmem:[%s596 + $0x30] sm:$0xf]
        %v1922 = vld [vmem:[%s596 + $0x34] sm:$0xf]
        %v1923 = vld [vmem:[%s596 + $0x38] sm:$0xf]
        %v1924 = vld [vmem:[%s596 + $0x3c] sm:$0xf]
        %v1941 = vunpack.c.l.b16 %v1909
        %v1942 = vunpack.c.l.b16 %v1910
        %v1943 = vunpack.c.l.b16 %v1911
        %v1944 = vunpack.c.l.b16 %v1912
        %v1945 = vunpack.c.l.b16 %v1913
        %v1946 = vunpack.c.l.b16 %v1914
        %v1947 = vunpack.c.l.b16 %v1915
        %v1948 = vunpack.c.l.b16 %v1916
        %v1949 = vunpack.c.l.b16 %v1917
        %v1950 = vunpack.c.l.b16 %v1918
        %v1951 = vunpack.c.l.b16 %v1919
        %v1952 = vunpack.c.l.b16 %v1920
        %v1953 = vunpack.c.l.b16 %v1921
        %v1954 = vunpack.c.l.b16 %v1922
        %v1955 = vunpack.c.l.b16 %v1923
        %v1956 = vunpack.c.l.b16 %v1924
        %v1957 = vpack.c.b16 %v1942, %v1941
        %v1958 = vpack.c.b16 %v1944, %v1943
        %v1959 = vpack.c.b16 %v1946, %v1945
        %v1960 = vpack.c.b16 %v1948, %v1947
        %v1961 = vpack.c.b16 %v1950, %v1949
        %v1962 = vpack.c.b16 %v1952, %v1951
        %v1963 = vpack.c.b16 %v1954, %v1953
        %v1964 = vpack.c.b16 %v1956, %v1955
        %1973 = vmatpush.bf16.msra.mxu0 %v1964
        %1974 = vmatpush.bf16.msra.mxu0 %v1963
        %1975 = vmatpush.bf16.msra.mxu0 %v1962
        %1976 = vmatpush.bf16.msra.mxu0 %v1961
        %1977 = vmatpush.bf16.msra.mxu0 %v1960
        %1978 = vmatpush.bf16.msra.mxu0 %v1959
        %1979 = vmatpush.bf16.msra.mxu0 %v1958
        %1980 = vmatpush.bf16.msra.mxu0 %v1957
        %1981 = vmatmul.bf16.gmra.mxu0 %v1901
        %v1982 = vpop.f32.mrf.mxu0
        %v1983 = vadd.f32 0.0, %v1982
        %v1984 = vpop.f32.mrf.mxu0
        %v1985 = vadd.f32 0.0, %v1984
        %1986 = vmatmul.bf16.gmra.mxu0 %v1902
        %v1987 = vpop.f32.mrf.mxu0
        %v1988 = vadd.f32 0.0, %v1987
        %v1989 = vpop.f32.mrf.mxu0
        %v1990 = vadd.f32 0.0, %v1989
        %1991 = vmatmul.bf16.gmra.mxu0 %v1903
        %v1992 = vpop.f32.mrf.mxu0
        %v1993 = vadd.f32 0.0, %v1992
        %v1994 = vpop.f32.mrf.mxu0
        %v1995 = vadd.f32 0.0, %v1994
        %1996 = vmatmul.bf16.gmra.mxu0 %v1904
        %v1997 = vpop.f32.mrf.mxu0
        %v1998 = vadd.f32 0.0, %v1997
        %v1999 = vpop.f32.mrf.mxu0
        %v2000 = vadd.f32 0.0, %v1999
        %2001 = vmatmul.bf16.gmra.mxu0 %v1905
        %v2002 = vpop.f32.mrf.mxu0
        %v2003 = vadd.f32 0.0, %v2002
        %v2004 = vpop.f32.mrf.mxu0
        %v2005 = vadd.f32 0.0, %v2004
        %2006 = vmatmul.bf16.gmra.mxu0 %v1906
        %v2007 = vpop.f32.mrf.mxu0
        %v2008 = vadd.f32 0.0, %v2007
        %v2009 = vpop.f32.mrf.mxu0
        %v2010 = vadd.f32 0.0, %v2009
        %2011 = vmatmul.bf16.gmra.mxu0 %v1907
        %v2012 = vpop.f32.mrf.mxu0
        %v2013 = vadd.f32 0.0, %v2012
        %v2014 = vpop.f32.mrf.mxu0
        %v2015 = vadd.f32 0.0, %v2014
        %2016 = vmatmul.bf16.gmra.mxu0 %v1908
        %v2017 = vpop.f32.mrf.mxu0
        %v2018 = vadd.f32 0.0, %v2017
        %v2019 = vpop.f32.mrf.mxu0
        %v2020 = vadd.f32 0.0, %v2019
        %2021 = vdwg.mxu0
        %v2022 = vld [vmem:[#allocation2] sm:$0xff]
        %v2023 = vld [vmem:[#allocation2 + $0x8] sm:$0xff]
        %v2024 = vld [vmem:[#allocation2 + $0x10] sm:$0xff]
        %v2025 = vld [vmem:[#allocation2 + $0x18] sm:$0xff]
        %v2026 = vld [vmem:[#allocation2 + $0x20] sm:$0xff]
        %v2027 = vld [vmem:[#allocation2 + $0x28] sm:$0xff]
        %v2028 = vld [vmem:[#allocation2 + $0x30] sm:$0xff]
        %v2029 = vld [vmem:[#allocation2 + $0x38] sm:$0xff]
        %v2030 = vld [vmem:[#allocation2 + $0x40] sm:$0xff]
        %v2031 = vld [vmem:[#allocation2 + $0x48] sm:$0xff]
        %v2032 = vld [vmem:[#allocation2 + $0x50] sm:$0xff]
        %v2033 = vld [vmem:[#allocation2 + $0x58] sm:$0xff]
        %v2034 = vld [vmem:[#allocation2 + $0x60] sm:$0xff]
        %v2035 = vld [vmem:[#allocation2 + $0x68] sm:$0xff]
        %v2036 = vld [vmem:[#allocation2 + $0x70] sm:$0xff]
        %v2037 = vld [vmem:[#allocation2 + $0x78] sm:$0xff]
        %v2054 = vunpack.c.l.b16 %v1227
        %v2055 = vunpack.c.l.b16 %v1228
        %v2056 = vunpack.c.l.b16 %v1229
        %v2057 = vunpack.c.l.b16 %v1230
        %v2058 = vunpack.c.l.b16 %v1231
        %v2059 = vunpack.c.l.b16 %v1232
        %v2060 = vunpack.c.l.b16 %v1233
        %v2061 = vunpack.c.l.b16 %v1234
        %v2062 = vunpack.c.l.b16 %v1235
        %v2063 = vunpack.c.l.b16 %v1236
        %v2064 = vunpack.c.l.b16 %v1237
        %v2065 = vunpack.c.l.b16 %v1238
        %v2066 = vunpack.c.l.b16 %v1239
        %v2067 = vunpack.c.l.b16 %v1240
        %v2068 = vunpack.c.l.b16 %v1241
        %v2069 = vunpack.c.l.b16 %v1242
        %v2070 = vpack.c.b16 %v2055, %v2054
        %v2071 = vpack.c.b16 %v2057, %v2056
        %v2072 = vpack.c.b16 %v2059, %v2058
        %v2073 = vpack.c.b16 %v2061, %v2060
        %v2074 = vpack.c.b16 %v2063, %v2062
        %v2075 = vpack.c.b16 %v2065, %v2064
        %v2076 = vpack.c.b16 %v2067, %v2066
        %v2077 = vpack.c.b16 %v2069, %v2068
        %2086 = vmatpush.bf16.msra.mxu0 %v2077
        %2087 = vmatpush.bf16.msra.mxu0 %v2076
        %2088 = vmatpush.bf16.msra.mxu0 %v2075
        %2089 = vmatpush.bf16.msra.mxu0 %v2074
        %2090 = vmatpush.bf16.msra.mxu0 %v2073
        %2091 = vmatpush.bf16.msra.mxu0 %v2072
        %2092 = vmatpush.bf16.msra.mxu0 %v2071
        %2093 = vmatpush.bf16.msra.mxu0 %v2070
        %2094 = vmatmul.bf16.gmra.mxu0 %v1219
        %v2095 = vpop.f32.mrf.mxu0
        %v2096 = vadd.f32 %v1983, %v2095
        %v2097 = vpop.f32.mrf.mxu0
        %v2098 = vadd.f32 %v1985, %v2097
        %2099 = vmatmul.bf16.gmra.mxu0 %v1220
        %v2100 = vpop.f32.mrf.mxu0
        %v2101 = vadd.f32 %v1988, %v2100
        %v2102 = vpop.f32.mrf.mxu0
        %v2103 = vadd.f32 %v1990, %v2102
        %2104 = vmatmul.bf16.gmra.mxu0 %v1221
        %v2105 = vpop.f32.mrf.mxu0
        %v2106 = vadd.f32 %v1993, %v2105
        %v2107 = vpop.f32.mrf.mxu0
        %v2108 = vadd.f32 %v1995, %v2107
        %2109 = vmatmul.bf16.gmra.mxu0 %v1222
        %v2110 = vpop.f32.mrf.mxu0
        %v2111 = vadd.f32 %v1998, %v2110
        %v2112 = vpop.f32.mrf.mxu0
        %v2113 = vadd.f32 %v2000, %v2112
        %2114 = vmatmul.bf16.gmra.mxu0 %v1223
        %v2115 = vpop.f32.mrf.mxu0
        %v2116 = vadd.f32 %v2003, %v2115
        %v2117 = vpop.f32.mrf.mxu0
        %v2118 = vadd.f32 %v2005, %v2117
        %2119 = vmatmul.bf16.gmra.mxu0 %v1224
        %v2120 = vpop.f32.mrf.mxu0
        %v2121 = vadd.f32 %v2008, %v2120
        %v2122 = vpop.f32.mrf.mxu0
        %v2123 = vadd.f32 %v2010, %v2122
        %2124 = vmatmul.bf16.gmra.mxu0 %v1225
        %v2125 = vpop.f32.mrf.mxu0
        %v2126 = vadd.f32 %v2013, %v2125
        %v2127 = vpop.f32.mrf.mxu0
        %v2128 = vadd.f32 %v2015, %v2127
        %2129 = vmatmul.bf16.gmra.mxu0 %v1226
        %v2130 = vpop.f32.mrf.mxu0
        %v2131 = vadd.f32 %v2018, %v2130
        %v2132 = vpop.f32.mrf.mxu0
        %v2133 = vadd.f32 %v2020, %v2132
        %2134 = vdwg.mxu0
        %v2135 = vadd.f32 %v2022, %v2096
        %v2136 = vadd.f32 %v2023, %v2098
        %v2137 = vadd.f32 %v2024, %v2101
        %v2138 = vadd.f32 %v2025, %v2103
        %v2139 = vadd.f32 %v2026, %v2106
        %v2140 = vadd.f32 %v2027, %v2108
        %v2141 = vadd.f32 %v2028, %v2111
        %v2142 = vadd.f32 %v2029, %v2113
        %v2143 = vadd.f32 %v2030, %v2116
        %v2144 = vadd.f32 %v2031, %v2118
        %v2145 = vadd.f32 %v2032, %v2121
        %v2146 = vadd.f32 %v2033, %v2123
        %v2147 = vadd.f32 %v2034, %v2126
        %v2148 = vadd.f32 %v2035, %v2128
        %v2149 = vadd.f32 %v2036, %v2131
        %v2150 = vadd.f32 %v2037, %v2133
        %2151 = vst [vmem:[#allocation2] sm:$0xff] %v2135
        %2152 = vst [vmem:[#allocation2 + $0x8] sm:$0xff] %v2136
        %2153 = vst [vmem:[#allocation2 + $0x10] sm:$0xff] %v2137
        %2154 = vst [vmem:[#allocation2 + $0x18] sm:$0xff] %v2138
        %2155 = vst [vmem:[#allocation2 + $0x20] sm:$0xff] %v2139
        %2156 = vst [vmem:[#allocation2 + $0x28] sm:$0xff] %v2140
        %2157 = vst [vmem:[#allocation2 + $0x30] sm:$0xff] %v2141
        %2158 = vst [vmem:[#allocation2 + $0x38] sm:$0xff] %v2142
        %2159 = vst [vmem:[#allocation2 + $0x40] sm:$0xff] %v2143
        %2160 = vst [vmem:[#allocation2 + $0x48] sm:$0xff] %v2144
        %2161 = vst [vmem:[#allocation2 + $0x50] sm:$0xff] %v2145
        %2162 = vst [vmem:[#allocation2 + $0x58] sm:$0xff] %v2146
        %2163 = vst [vmem:[#allocation2 + $0x60] sm:$0xff] %v2147
        %2164 = vst [vmem:[#allocation2 + $0x68] sm:$0xff] %v2148
        %2165 = vst [vmem:[#allocation2 + $0x70] sm:$0xff] %v2149
        %2166 = vst [vmem:[#allocation2 + $0x78] sm:$0xff] %v2150
        %p2167 = scmp.eq.s32.totalorder %s31, 1
        // Predicated region
        $region125: #{llama4_moe_forward.1} parent=111 // pred_check
          %p2168 = pneg %p2167
        $region126: #{llama4_moe_forward.1} parent=111 // pred_check_branch
          %2170 = sbr.rel (%p2168) target = $region128
        $region127: #{llama4_moe_forward.1} parent=111 // pred_region
          %v2171 = vld [vmem:[#allocation2] sm:$0xff]
          %v2172 = vld [vmem:[#allocation2 + $0x8] sm:$0xff]
          %v2173 = vld [vmem:[#allocation2 + $0x10] sm:$0xff]
          %v2174 = vld [vmem:[#allocation2 + $0x18] sm:$0xff]
          %v2175 = vld [vmem:[#allocation2 + $0x20] sm:$0xff]
          %v2176 = vld [vmem:[#allocation2 + $0x28] sm:$0xff]
          %v2177 = vld [vmem:[#allocation2 + $0x30] sm:$0xff]
          %v2178 = vld [vmem:[#allocation2 + $0x38] sm:$0xff]
          %v2179 = vld [vmem:[#allocation2 + $0x40] sm:$0xff]
          %v2180 = vld [vmem:[#allocation2 + $0x48] sm:$0xff]
          %v2181 = vld [vmem:[#allocation2 + $0x50] sm:$0xff]
          %v2182 = vld [vmem:[#allocation2 + $0x58] sm:$0xff]
          %v2183 = vld [vmem:[#allocation2 + $0x60] sm:$0xff]
          %v2184 = vld [vmem:[#allocation2 + $0x68] sm:$0xff]
          %v2185 = vld [vmem:[#allocation2 + $0x70] sm:$0xff]
          %v2186 = vld [vmem:[#allocation2 + $0x78] sm:$0xff]
          %v2187 = vpack.c.bf16 %v2171, %v2171
          %v2188 = vpack.c.bf16 %v2172, %v2172
          %v2189 = vpack.c.bf16 %v2173, %v2173
          %v2190 = vpack.c.bf16 %v2174, %v2174
          %v2191 = vpack.c.bf16 %v2175, %v2175
          %v2192 = vpack.c.bf16 %v2176, %v2176
          %v2193 = vpack.c.bf16 %v2177, %v2177
          %v2194 = vpack.c.bf16 %v2178, %v2178
          %v2195 = vpack.c.bf16 %v2179, %v2179
          %v2196 = vpack.c.bf16 %v2180, %v2180
          %v2197 = vpack.c.bf16 %v2181, %v2181
          %v2198 = vpack.c.bf16 %v2182, %v2182
          %v2199 = vpack.c.bf16 %v2183, %v2183
          %v2200 = vpack.c.bf16 %v2184, %v2184
          %v2201 = vpack.c.bf16 %v2185, %v2185
          %v2202 = vpack.c.bf16 %v2186, %v2186
          %2203 = vst [vmem:[%s603] sm:$0xf] %v2187
          %2204 = vst [vmem:[%s603 + $0x4] sm:$0xf] %v2188
          %2205 = vst [vmem:[%s603 + $0x8] sm:$0xf] %v2189
          %2206 = vst [vmem:[%s603 + $0xc] sm:$0xf] %v2190
          %2207 = vst [vmem:[%s603 + $0x10] sm:$0xf] %v2191
          %2208 = vst [vmem:[%s603 + $0x14] sm:$0xf] %v2192
          %2209 = vst [vmem:[%s603 + $0x18] sm:$0xf] %v2193
          %2210 = vst [vmem:[%s603 + $0x1c] sm:$0xf] %v2194
          %2211 = vst [vmem:[%s603 + $0x20] sm:$0xf] %v2195
          %2212 = vst [vmem:[%s603 + $0x24] sm:$0xf] %v2196
          %2213 = vst [vmem:[%s603 + $0x28] sm:$0xf] %v2197
          %2214 = vst [vmem:[%s603 + $0x2c] sm:$0xf] %v2198
          %2215 = vst [vmem:[%s603 + $0x30] sm:$0xf] %v2199
          %2216 = vst [vmem:[%s603 + $0x34] sm:$0xf] %v2200
          %2217 = vst [vmem:[%s603 + $0x38] sm:$0xf] %v2201
          %2218 = vst [vmem:[%s603 + $0x3c] sm:$0xf] %v2202
        $region128: #{llama4_moe_forward.1} parent=111 // pred_fallthru
          _
        %s2219 = smul.u32 16, %s30
        %p2220 = scmp.lt.s32.totalorder %s2219, 143
        %s2221 = scalar_select %p2220, %s2219, 143
        %s2222 = smul.addr %s2221, 4
        %s2223 = scalar_lea.vmem %s7, %s2222
        // Predicated region
        $region129: #{llama4_moe_forward.1} parent=111 // pred_check
          %p2224 = pneg %p220
        $region130: #{llama4_moe_forward.1} parent=111 // pred_check_branch
          %2226 = sbr.rel (%p2224) target = $region132
        $region131: #{llama4_moe_forward.1} parent=111 // pred_region
          %s2227 = smul.u32 16, %s30
        $region132: #{llama4_moe_forward.1} parent=111 // pred_fallthru
          _
      $region112: #{llama4_moe_forward.1} parent=5 // pred_fallthru
        _
      %p2228 = scmp.le.s32.totalorder 2, %s21
      // Predicated region
      $region133: #{llama4_moe_forward.1} parent=5 // pred_check
        %p2229 = pneg %p2228
      $region134: #{llama4_moe_forward.1} parent=5 // pred_check_branch
        %2231 = sbr.rel (%p2229) target = $region136
      $region135: #{llama4_moe_forward.1} parent=5 // pred_region
        %s2232 = ssub.s32 %s21, 2
        // Predicated region
        $region137: #{llama4_moe_forward.1} parent=135 // pred_check
          %p2233 = pneg %p226
        $region138: #{llama4_moe_forward.1} parent=135 // pred_check_branch
          %2235 = sbr.rel (%p2233) target = $region140
        $region139: #{llama4_moe_forward.1} parent=135 // pred_region
          %s2236 = smul.u32 16, %s32
          %p2237 = scmp.lt.s32.totalorder %s2236, 143
          %s2238 = scalar_select %p2237, %s2236, 143
          %s2239 = smul.addr %s2238, 4
          %s2240 = scalar_lea.vmem %s7, %s2239
        $region140: #{llama4_moe_forward.1} parent=135 // pred_fallthru
          _
      $region136: #{llama4_moe_forward.1} parent=5 // pred_fallthru
        _
    $region6: #{llama4_moe_forward.1} parent=1 // loop_footer
      %s25 = sadd.s32 1, %s21
    $region7: #{llama4_moe_forward.1} parent=1 // loop_footer_branch
      %20 = sbr.rel target = $region3
    $region8: #{llama4_moe_forward.1} parent=1 // loop_exit
      _

</llo_original>
